<compile_context>
chip_gen: v7x
topology: tpu7x:2x2x1
jax: 0.10.0
libtpu: 0.0.40
codegen_flags: <defaults>
</compile_context>

<pallas_src>
import jax
import jax.numpy as jnp
import numpy as np
from jax.experimental import pallas as pl
from jax.experimental.pallas import tpu as pltpu


def _softmax(z, axis):
    m = jnp.max(z, axis=axis, keepdims=True)
    e = jnp.exp(z - m)
    return e / jnp.sum(e, axis=axis, keepdims=True)   # exact divide (free here)


def _single_tensorcore_chip():
    """Best-effort: True for v5e / v6e (one TensorCore per chip)."""
    try:
        kind = jax.devices()[0].device_kind.lower()
    except Exception:
        return False
    return any(tag in kind for tag in ("lite", "v5e", "v6e"))


def _make_kernel(bb, fin):
    """Kernel over a block of `bb` batch elements, statically unrolled."""

    def kernel(x_ref, adj_ref, wr1_ref, wrb1_ref, wa1t_ref, ba1_ref,
               wc2_ref, b2_ref, wa2t_ref, ba2_ref, out_ref):
        for b in range(bb):          # static unroll -> ILP across batch chains
            xa = x_ref[b]            # (N, F+1), last column is all-ones
            adj = adj_ref[b]         # (N, N)

            # ---------------- layer 1 (DenseSAGEConv + assign + pool) --------
            # adj @ [x | 1]: features and row-degree in one MXU pass.
            agg = jnp.dot(adj, xa, preferred_element_type=jnp.float32)   # (N, F+1)
            deg = jnp.maximum(agg[:, fin:fin + 1], 1.0)                  # clamp(min=1)
            mean = agg / deg
            # Two accumulating dots (no lane concat at K=16); bias is folded
            # into wrb1 via the ones column of xa; w_rel is zero-padded so the
            # degree column of `mean` contributes nothing.
            h = (jnp.dot(mean, wr1_ref[...], preferred_element_type=jnp.float32)
                 + jnp.dot(xa, wrb1_ref[...], preferred_element_type=jnp.float32))
            x1 = jnp.maximum(h, 0.0)                                     # (N, H)

            # Assignment, transposed: s_T[t, n].  Node softmax = lane reduce.
            sp = jax.lax.dot_general(
                wa1t_ref[...], x1, (((1,), (1,)), ((), ())),
                preferred_element_type=jnp.float32) + ba1_ref[...]       # (T1, N)
            s = _softmax(_softmax(sp, axis=-1), axis=0)   # node dim, then cluster

            x1p = jnp.dot(s, x1, preferred_element_type=jnp.float32)     # (T1, H)
            sa = jnp.dot(s, adj, preferred_element_type=jnp.float32)     # (T1, N)
            adj1 = jax.lax.dot_general(
                sa, s, (((1,), (1,)), ((), ())),
                preferred_element_type=jnp.float32)                      # (T1, T1)

            # ---------------- layer 2 (adj_pool of this layer is unused) -----
            agg2 = jnp.dot(adj1, x1p, preferred_element_type=jnp.float32)
            deg2 = jnp.maximum(jnp.sum(adj1, axis=-1, keepdims=True), 1.0)
            mean2 = agg2 / deg2
            # K = 2*128 = 256 matches the MXU depth; both halves are 128-lane
            # aligned so this concat is free (no relayout).
            feat2 = jnp.concatenate([mean2, x1p], axis=-1)               # (T1, 2H)
            h2 = jnp.dot(feat2, wc2_ref[...],
                         preferred_element_type=jnp.float32) + b2_ref[...]
            x2 = jnp.maximum(h2, 0.0)                                    # (T1, F2)

            sp2 = jax.lax.dot_general(
                wa2t_ref[...], x2, (((1,), (1,)), ((), ())),
                preferred_element_type=jnp.float32) + ba2_ref[...]       # (T2, T1)
            s2 = _softmax(_softmax(sp2, axis=-1), axis=0)

            x2p = jnp.dot(s2, x2, preferred_element_type=jnp.float32)    # (T2, F2)
            out_ref[b] = x2p.astype(out_ref.dtype)

    return kernel


def diffpool_net(x, adj, params1, params2, *, batch_grid=None):
    """Fused DiffPoolNet forward. x: (B,N,F), adj: (B,N,N) -> (B, T2, F2)."""
    B, N, Fin = x.shape
    w_rel1, w_root1, b1, w_assign1, b_assign1 = params1
    w_rel2, w_root2, b2, w_assign2, b_assign2 = params2
    H = w_rel1.shape[1]
    F2 = w_rel2.shape[1]
    T2 = w_assign2.shape[1]

    # ---- host-side layout plumbing (all tiny, done once under jit) ----------
    x_aug = jnp.concatenate([x, jnp.ones((B, N, 1), x.dtype)], axis=-1)   # (B,N,F+1)
    wr1 = jnp.concatenate([w_rel1, jnp.zeros((1, H), w_rel1.dtype)], 0)   # (F+1,H)
    wrb1 = jnp.concatenate([w_root1, b1.reshape(1, H)], 0)                # (F+1,H)
    wa1t = w_assign1.T                                                    # (T1,H)
    ba1 = b_assign1.reshape(-1, 1)                                        # (T1,1)
    wc2 = jnp.concatenate([w_rel2, w_root2], 0)                           # (2H,F2)
    b2_2d = b2.reshape(1, -1)                                             # (1,F2)
    wa2t = w_assign2.T                                                    # (T2,F2)
    ba2 = b_assign2.reshape(-1, 1)                                        # (T2,1)

    # Batch strategy: fold B into one grid step on single-TC chips (latency
    # bound -> interleave both chains); keep a parallel batch grid otherwise.
    if batch_grid is None:
        batch_grid = not _single_tensorcore_chip()
    bb = 1 if batch_grid else B
    grid = (B // bb,)

    def const_spec(a):
        # Constant index_map: weights fetched once, resident across grid steps.
        return pl.BlockSpec(a.shape, lambda i: (0,) * a.ndim)

    return pl.pallas_call(
        _make_kernel(bb, Fin),
        out_shape=jax.ShapeDtypeStruct((B, T2, F2), jnp.float32),
        grid_spec=pltpu.PrefetchScalarGridSpec(
            num_scalar_prefetch=0,
            grid=grid,
            in_specs=[
                pl.BlockSpec((bb, N, Fin + 1), lambda i: (i, 0, 0)),
                pl.BlockSpec((bb, N, N), lambda i: (i, 0, 0)),
                const_spec(wr1), const_spec(wrb1), const_spec(wa1t), const_spec(ba1),
                const_spec(wc2), const_spec(b2_2d), const_spec(wa2t), const_spec(ba2),
            ],
            out_specs=pl.BlockSpec((bb, T2, F2), lambda i: (i, 0, 0)),
        ),
        compiler_params=pltpu.CompilerParams(
            dimension_semantics=("parallel",) if batch_grid else ("arbitrary",)),
    )(x_aug, adj, wr1, wrb1, wa1t, ba1, wc2, b2_2d, wa2t, ba2)


# ---------------- pure-JAX reference (exact f32, for correctness check) ------
def _ref_layer(x, adj, params):
    w_rel, w_root, b, w_assign, b_assign = params
    hp = jax.lax.Precision.HIGHEST
    agg = jnp.einsum('bij,bjf->bif', adj, x, precision=hp)
    deg = jnp.maximum(jnp.sum(adj, axis=-1, keepdims=True), 1.0)
    h = (jnp.einsum('bnf,fo->bno', agg / deg, w_rel, precision=hp)
         + jnp.einsum('bnf,fo->bno', x, w_root, precision=hp) + b)
    x1 = jax.nn.relu(h)
    sp = jnp.einsum('bnf,ft->bnt', x1, w_assign, precision=hp) + b_assign
    s = jax.nn.softmax(jax.nn.softmax(sp, axis=1), axis=-1)
    xp = jnp.einsum('bnt,bnf->btf', s, x1, precision=hp)
    ap = jnp.einsum('bnt,bnm,bms->bts', s, adj, s, precision=hp)
    return xp, ap


def _ref_net(x, adj, p1, p2):
    x, adj = _ref_layer(x, adj, p1)
    x, adj = _ref_layer(x, adj, p2)
    return x


# ---------------- deterministic parameter init (synthetic) -------------------
def init_layer_params(key, fin, fout, t):
    k1, k2, k3, k4, k5 = jax.random.split(key, 5)
    s_in = 1.0 / np.sqrt(fin)
    s_out = 1.0 / np.sqrt(fout)
    # weights stored as (in, out) = torch Linear weight.T
    w_rel = jax.random.uniform(k1, (fin, fout), jnp.float32, -s_in, s_in)
    w_root = jax.random.uniform(k2, (fin, fout), jnp.float32, -s_in, s_in)
    b = jax.random.uniform(k3, (fout,), jnp.float32, -s_in, s_in)
    w_assign = jax.random.uniform(k4, (fout, t), jnp.float32, -s_out, s_out)
    b_assign = jax.random.uniform(k5, (t,), jnp.float32, -s_out, s_out)
    return (w_rel, w_root, b, w_assign, b_assign)


if __name__ == "__main__":
    key = jax.random.PRNGKey(0)
    kx, ka, k1, k2 = jax.random.split(key, 4)

    # Small shapes consistent with the module:
    # DiffPoolNet(num_features=16, num_nodes=64, intermediate_nodes=16,
    #             target_nodes=8, final_features=64); hidden=128 as in the code.
    B, N, F = 2, 64, 16
    INTER, TARGET, FINAL = 16, 8, 64

    x = jax.random.normal(kx, (B, N, F), jnp.float32)
    adj = (jax.random.uniform(ka, (B, N, N)) > 0.7).astype(jnp.float32)
    adj = jnp.maximum(adj, jnp.transpose(adj, (0, 2, 1)))  # symmetric 0/1 adjacency

    params1 = init_layer_params(k1, F, 128, INTER)
    params2 = init_layer_params(k2, 128, FINAL, TARGET)

    out = jax.block_until_ready(diffpool_net(x, adj, params1, params2))
    ref = jax.block_until_ready(_ref_net(x, adj, params1, params2))

    assert out.shape == (B, TARGET, FINAL), out.shape
    # Exact division in-kernel (no approx reciprocals) -> only residual error
    # is MXU f32 matmul rounding; tolerance tightened vs. the previous 1e-2.
    np.testing.assert_allclose(np.asarray(out), np.asarray(ref),
                               rtol=5e-3, atol=5e-3)
    print("KERNEL_OK")
</pallas_src>

<mosaic_0001>
module attributes {stable_mosaic.version = 11 : i64} {
  func.func @kernel(%arg0: i32, %arg1: memref<1x64x17xf32, #tpu.memory_space<vmem>>, %arg2: memref<1x64x64xf32, #tpu.memory_space<vmem>>, %arg3: memref<17x128xf32, #tpu.memory_space<vmem>>, %arg4: memref<17x128xf32, #tpu.memory_space<vmem>>, %arg5: memref<16x128xf32, #tpu.memory_space<vmem>>, %arg6: memref<16x1xf32, #tpu.memory_space<vmem>>, %arg7: memref<256x64xf32, #tpu.memory_space<vmem>>, %arg8: memref<1x64xf32, #tpu.memory_space<vmem>>, %arg9: memref<8x64xf32, #tpu.memory_space<vmem>>, %arg10: memref<8x1xf32, #tpu.memory_space<vmem>>, %arg11: memref<1x8x64xf32, #tpu.memory_space<vmem>>) attributes {dimension_semantics = [#tpu.dimension_semantics<parallel>], iteration_bounds = array<i64: 2>, scalar_prefetch = 0 : i64, scratch_operands = 0 : i64, tpu.core_type = #tpu.core_type<tc>, window_params = [{transform_indices = @transform_0, window_bounds = array<i64: 1, 64, 17>}, {transform_indices = @transform_1, window_bounds = array<i64: 1, 64, 64>}, {pipeline_mode = #tpu.pipeline_mode<synchronous>, transform_indices = @transform_2, window_bounds = array<i64: 17, 128>}, {pipeline_mode = #tpu.pipeline_mode<synchronous>, transform_indices = @transform_3, window_bounds = array<i64: 17, 128>}, {pipeline_mode = #tpu.pipeline_mode<synchronous>, transform_indices = @transform_4, window_bounds = array<i64: 16, 128>}, {pipeline_mode = #tpu.pipeline_mode<synchronous>, transform_indices = @transform_5, window_bounds = array<i64: 16, 1>}, {pipeline_mode = #tpu.pipeline_mode<synchronous>, transform_indices = @transform_6, window_bounds = array<i64: 256, 64>}, {pipeline_mode = #tpu.pipeline_mode<synchronous>, transform_indices = @transform_7, window_bounds = array<i64: 1, 64>}, {pipeline_mode = #tpu.pipeline_mode<synchronous>, transform_indices = @transform_8, window_bounds = array<i64: 8, 64>}, {pipeline_mode = #tpu.pipeline_mode<synchronous>, transform_indices = @transform_9, window_bounds = array<i64: 8, 1>}, {transform_indices = @transform_10, window_bounds = array<i64: 1, 8, 64>}]} {
    %c0 = arith.constant 0 : index
    %c0_0 = arith.constant 0 : index
    %c0_1 = arith.constant 0 : index
    %0 = vector.load %arg1[%c0, %c0_0, %c0_1] : memref<1x64x17xf32, #tpu.memory_space<vmem>>, vector<1x64x17xf32>
    %1 = vector.shape_cast %0 : vector<1x64x17xf32> to vector<64x17xf32>
    %c0_2 = arith.constant 0 : index
    %c0_3 = arith.constant 0 : index
    %c0_4 = arith.constant 0 : index
    %2 = vector.load %arg2[%c0_2, %c0_3, %c0_4] : memref<1x64x64xf32, #tpu.memory_space<vmem>>, vector<1x64x64xf32>
    %3 = vector.shape_cast %2 : vector<1x64x64xf32> to vector<64x64xf32>
    %cst = arith.constant dense<0.000000e+00> : vector<64x17xf32>
    %4 = tpu.matmul %3, %1, %cst {dimension_numbers = #tpu.dot_dimension_numbers<[1], [0], [0], [1], [0, 0, 1, 1], [], []>} : vector<64x64xf32>, vector<64x17xf32>, vector<64x17xf32> -> vector<64x17xf32>
    %5 = vector.extract_strided_slice %4 {offsets = [0, 16], sizes = [64, 1], strides = [1, 1]} : vector<64x17xf32> to vector<64x1xf32>
    %cst_5 = arith.constant 1.000000e+00 : f32
    %6 = vector.broadcast %cst_5 : f32 to vector<64x1xf32>
    %7 = arith.maximumf %5, %6 : vector<64x1xf32>
    %8 = vector.broadcast %7 : vector<64x1xf32> to vector<64x17xf32>
    %9 = arith.divf %4, %8 : vector<64x17xf32>
    %c0_6 = arith.constant 0 : index
    %c0_7 = arith.constant 0 : index
    %10 = vector.load %arg3[%c0_6, %c0_7] : memref<17x128xf32, #tpu.memory_space<vmem>>, vector<17x128xf32>
    %cst_8 = arith.constant dense<0.000000e+00> : vector<64x128xf32>
    %11 = tpu.matmul %9, %10, %cst_8 {dimension_numbers = #tpu.dot_dimension_numbers<[1], [0], [0], [1], [0, 0, 1, 1], [], []>} : vector<64x17xf32>, vector<17x128xf32>, vector<64x128xf32> -> vector<64x128xf32>
    %c0_9 = arith.constant 0 : index
    %c0_10 = arith.constant 0 : index
    %12 = vector.load %arg4[%c0_9, %c0_10] : memref<17x128xf32, #tpu.memory_space<vmem>>, vector<17x128xf32>
    %cst_11 = arith.constant dense<0.000000e+00> : vector<64x128xf32>
    %13 = tpu.matmul %1, %12, %cst_11 {dimension_numbers = #tpu.dot_dimension_numbers<[1], [0], [0], [1], [0, 0, 1, 1], [], []>} : vector<64x17xf32>, vector<17x128xf32>, vector<64x128xf32> -> vector<64x128xf32>
    %14 = arith.addf %11, %13 : vector<64x128xf32>
    %cst_12 = arith.constant 0.000000e+00 : f32
    %15 = vector.broadcast %cst_12 : f32 to vector<64x128xf32>
    %16 = arith.maximumf %14, %15 : vector<64x128xf32>
    %c0_13 = arith.constant 0 : index
    %c0_14 = arith.constant 0 : index
    %17 = vector.load %arg5[%c0_13, %c0_14] : memref<16x128xf32, #tpu.memory_space<vmem>>, vector<16x128xf32>
    %cst_15 = arith.constant dense<0.000000e+00> : vector<16x64xf32>
    %18 = tpu.matmul %17, %16, %cst_15 {dimension_numbers = #tpu.dot_dimension_numbers<[1], [1], [0], [0], [0, 0, 1, 0], [], []>} : vector<16x128xf32>, vector<64x128xf32>, vector<16x64xf32> -> vector<16x64xf32>
    %c0_16 = arith.constant 0 : index
    %c0_17 = arith.constant 0 : index
    %19 = vector.load %arg6[%c0_16, %c0_17] : memref<16x1xf32, #tpu.memory_space<vmem>>, vector<16x1xf32>
    %20 = vector.broadcast %19 : vector<16x1xf32> to vector<16x64xf32>
    %21 = arith.addf %18, %20 : vector<16x64xf32>
    %cst_18 = arith.constant dense<0xFF800000> : vector<16xf32>
    %22 = vector.multi_reduction <maximumf>, %21, %cst_18 [1] : vector<16x64xf32> to vector<16xf32>
    %23 = vector.shape_cast %22 : vector<16xf32> to vector<16x1xf32>
    %24 = vector.broadcast %23 : vector<16x1xf32> to vector<16x64xf32>
    %25 = arith.subf %21, %24 : vector<16x64xf32>
    %26 = math.exp %25 : vector<16x64xf32>
    %cst_19 = arith.constant dense<0.000000e+00> : vector<16xf32>
    %27 = vector.multi_reduction <add>, %26, %cst_19 [1] : vector<16x64xf32> to vector<16xf32>
    %28 = vector.shape_cast %27 : vector<16xf32> to vector<16x1xf32>
    %29 = vector.broadcast %28 : vector<16x1xf32> to vector<16x64xf32>
    %30 = arith.divf %26, %29 : vector<16x64xf32>
    %cst_20 = arith.constant dense<0xFF800000> : vector<64xf32>
    %31 = vector.multi_reduction <maximumf>, %30, %cst_20 [0] : vector<16x64xf32> to vector<64xf32>
    %32 = vector.shape_cast %31 : vector<64xf32> to vector<1x64xf32>
    %33 = vector.broadcast %32 : vector<1x64xf32> to vector<16x64xf32>
    %34 = arith.subf %30, %33 : vector<16x64xf32>
    %35 = math.exp %34 : vector<16x64xf32>
    %cst_21 = arith.constant dense<0.000000e+00> : vector<64xf32>
    %36 = vector.multi_reduction <add>, %35, %cst_21 [0] : vector<16x64xf32> to vector<64xf32>
    %37 = vector.shape_cast %36 : vector<64xf32> to vector<1x64xf32>
    %38 = vector.broadcast %37 : vector<1x64xf32> to vector<16x64xf32>
    %39 = arith.divf %35, %38 : vector<16x64xf32>
    %cst_22 = arith.constant dense<0.000000e+00> : vector<16x128xf32>
    %40 = tpu.matmul %39, %16, %cst_22 {dimension_numbers = #tpu.dot_dimension_numbers<[1], [0], [0], [1], [0, 0, 1, 1], [], []>} : vector<16x64xf32>, vector<64x128xf32>, vector<16x128xf32> -> vector<16x128xf32>
    %cst_23 = arith.constant dense<0.000000e+00> : vector<16x64xf32>
    %41 = tpu.matmul %39, %3, %cst_23 {dimension_numbers = #tpu.dot_dimension_numbers<[1], [0], [0], [1], [0, 0, 1, 1], [], []>} : vector<16x64xf32>, vector<64x64xf32>, vector<16x64xf32> -> vector<16x64xf32>
    %cst_24 = arith.constant dense<0.000000e+00> : vector<16x16xf32>
    %42 = tpu.matmul %41, %39, %cst_24 {dimension_numbers = #tpu.dot_dimension_numbers<[1], [1], [0], [0], [0, 0, 1, 0], [], []>} : vector<16x64xf32>, vector<16x64xf32>, vector<16x16xf32> -> vector<16x16xf32>
    %cst_25 = arith.constant dense<0.000000e+00> : vector<16x128xf32>
    %43 = tpu.matmul %42, %40, %cst_25 {dimension_numbers = #tpu.dot_dimension_numbers<[1], [0], [0], [1], [0, 0, 1, 1], [], []>} : vector<16x16xf32>, vector<16x128xf32>, vector<16x128xf32> -> vector<16x128xf32>
    %cst_26 = arith.constant dense<0.000000e+00> : vector<16xf32>
    %44 = vector.multi_reduction <add>, %42, %cst_26 [1] : vector<16x16xf32> to vector<16xf32>
    %45 = vector.shape_cast %44 : vector<16xf32> to vector<16x1xf32>
    %cst_27 = arith.constant 1.000000e+00 : f32
    %46 = vector.broadcast %cst_27 : f32 to vector<16x1xf32>
    %47 = arith.maximumf %45, %46 : vector<16x1xf32>
    %48 = vector.broadcast %47 : vector<16x1xf32> to vector<16x128xf32>
    %49 = arith.divf %43, %48 : vector<16x128xf32>
    %50 = tpu.concatenate %49, %40 in 1 : vector<16x128xf32>, vector<16x128xf32> -> vector<16x256xf32>
    %c0_28 = arith.constant 0 : index
    %c0_29 = arith.constant 0 : index
    %51 = vector.load %arg7[%c0_28, %c0_29] : memref<256x64xf32, #tpu.memory_space<vmem>>, vector<256x64xf32>
    %cst_30 = arith.constant dense<0.000000e+00> : vector<16x64xf32>
    %52 = tpu.matmul %50, %51, %cst_30 {dimension_numbers = #tpu.dot_dimension_numbers<[1], [0], [0], [1], [0, 0, 1, 1], [], []>} : vector<16x256xf32>, vector<256x64xf32>, vector<16x64xf32> -> vector<16x64xf32>
    %c0_31 = arith.constant 0 : index
    %c0_32 = arith.constant 0 : index
    %53 = vector.load %arg8[%c0_31, %c0_32] : memref<1x64xf32, #tpu.memory_space<vmem>>, vector<1x64xf32>
    %54 = vector.broadcast %53 : vector<1x64xf32> to vector<16x64xf32>
    %55 = arith.addf %52, %54 : vector<16x64xf32>
    %cst_33 = arith.constant 0.000000e+00 : f32
    %56 = vector.broadcast %cst_33 : f32 to vector<16x64xf32>
    %57 = arith.maximumf %55, %56 : vector<16x64xf32>
    %c0_34 = arith.constant 0 : index
    %c0_35 = arith.constant 0 : index
    %58 = vector.load %arg9[%c0_34, %c0_35] : memref<8x64xf32, #tpu.memory_space<vmem>>, vector<8x64xf32>
    %cst_36 = arith.constant dense<0.000000e+00> : vector<8x16xf32>
    %59 = tpu.matmul %58, %57, %cst_36 {dimension_numbers = #tpu.dot_dimension_numbers<[1], [1], [0], [0], [0, 0, 1, 0], [], []>} : vector<8x64xf32>, vector<16x64xf32>, vector<8x16xf32> -> vector<8x16xf32>
    %c0_37 = arith.constant 0 : index
    %c0_38 = arith.constant 0 : index
    %60 = vector.load %arg10[%c0_37, %c0_38] : memref<8x1xf32, #tpu.memory_space<vmem>>, vector<8x1xf32>
    %61 = vector.broadcast %60 : vector<8x1xf32> to vector<8x16xf32>
    %62 = arith.addf %59, %61 : vector<8x16xf32>
    %cst_39 = arith.constant dense<0xFF800000> : vector<8xf32>
    %63 = vector.multi_reduction <maximumf>, %62, %cst_39 [1] : vector<8x16xf32> to vector<8xf32>
    %64 = vector.shape_cast %63 : vector<8xf32> to vector<8x1xf32>
    %65 = vector.broadcast %64 : vector<8x1xf32> to vector<8x16xf32>
    %66 = arith.subf %62, %65 : vector<8x16xf32>
    %67 = math.exp %66 : vector<8x16xf32>
    %cst_40 = arith.constant dense<0.000000e+00> : vector<8xf32>
    %68 = vector.multi_reduction <add>, %67, %cst_40 [1] : vector<8x16xf32> to vector<8xf32>
    %69 = vector.shape_cast %68 : vector<8xf32> to vector<8x1xf32>
    %70 = vector.broadcast %69 : vector<8x1xf32> to vector<8x16xf32>
    %71 = arith.divf %67, %70 : vector<8x16xf32>
    %cst_41 = arith.constant dense<0xFF800000> : vector<16xf32>
    %72 = vector.multi_reduction <maximumf>, %71, %cst_41 [0] : vector<8x16xf32> to vector<16xf32>
    %73 = vector.shape_cast %72 : vector<16xf32> to vector<1x16xf32>
    %74 = vector.broadcast %73 : vector<1x16xf32> to vector<8x16xf32>
    %75 = arith.subf %71, %74 : vector<8x16xf32>
    %76 = math.exp %75 : vector<8x16xf32>
    %cst_42 = arith.constant dense<0.000000e+00> : vector<16xf32>
    %77 = vector.multi_reduction <add>, %76, %cst_42 [0] : vector<8x16xf32> to vector<16xf32>
    %78 = vector.shape_cast %77 : vector<16xf32> to vector<1x16xf32>
    %79 = vector.broadcast %78 : vector<1x16xf32> to vector<8x16xf32>
    %80 = arith.divf %76, %79 : vector<8x16xf32>
    %cst_43 = arith.constant dense<0.000000e+00> : vector<8x64xf32>
    %81 = tpu.matmul %80, %57, %cst_43 {dimension_numbers = #tpu.dot_dimension_numbers<[1], [0], [0], [1], [0, 0, 1, 1], [], []>} : vector<8x16xf32>, vector<16x64xf32>, vector<8x64xf32> -> vector<8x64xf32>
    %c0_44 = arith.constant 0 : index
    %c0_45 = arith.constant 0 : index
    %c0_46 = arith.constant 0 : index
    %82 = vector.load %arg11[%c0_44, %c0_45, %c0_46] : memref<1x8x64xf32, #tpu.memory_space<vmem>>, vector<1x8x64xf32>
    %83 = vector.shape_cast %82 : vector<1x8x64xf32> to vector<8x64xf32>
    %84 = vector.shape_cast %81 : vector<8x64xf32> to vector<1x8x64xf32>
    tpu.vector_store %arg11[%c0_44, %c0_45, %c0_46], %84 {strides = array<i32>} : memref<1x8x64xf32, #tpu.memory_space<vmem>>, vector<1x8x64xf32>,
    return
  }
  func.func @transform_0(%arg0: i32) -> (i32, i32, i32) {
    %c0_i32 = arith.constant 0 : i32
    %c0_i32_0 = arith.constant 0 : i32
    %c0_i32_1 = arith.constant 0 : i32
    return %arg0, %c0_i32, %c0_i32_0 : i32, i32, i32
  }
  func.func @transform_1(%arg0: i32) -> (i32, i32, i32) {
    %c0_i32 = arith.constant 0 : i32
    %c0_i32_0 = arith.constant 0 : i32
    %c0_i32_1 = arith.constant 0 : i32
    return %arg0, %c0_i32, %c0_i32_0 : i32, i32, i32
  }
  func.func @transform_2(%arg0: i32) -> (i32, i32) {
    %c0_i32 = arith.constant 0 : i32
    %c0_i32_0 = arith.constant 0 : i32
    %c0_i32_1 = arith.constant 0 : i32
    return %c0_i32, %c0_i32_0 : i32, i32
  }
  func.func @transform_3(%arg0: i32) -> (i32, i32) {
    %c0_i32 = arith.constant 0 : i32
    %c0_i32_0 = arith.constant 0 : i32
    %c0_i32_1 = arith.constant 0 : i32
    return %c0_i32, %c0_i32_0 : i32, i32
  }
  func.func @transform_4(%arg0: i32) -> (i32, i32) {
    %c0_i32 = arith.constant 0 : i32
    %c0_i32_0 = arith.constant 0 : i32
    %c0_i32_1 = arith.constant 0 : i32
    return %c0_i32, %c0_i32_0 : i32, i32
  }
  func.func @transform_5(%arg0: i32) -> (i32, i32) {
    %c0_i32 = arith.constant 0 : i32
    %c0_i32_0 = arith.constant 0 : i32
    %c0_i32_1 = arith.constant 0 : i32
    return %c0_i32, %c0_i32_0 : i32, i32
  }
  func.func @transform_6(%arg0: i32) -> (i32, i32) {
    %c0_i32 = arith.constant 0 : i32
    %c0_i32_0 = arith.constant 0 : i32
    %c0_i32_1 = arith.constant 0 : i32
    return %c0_i32, %c0_i32_0 : i32, i32
  }
  func.func @transform_7(%arg0: i32) -> (i32, i32) {
    %c0_i32 = arith.constant 0 : i32
    %c0_i32_0 = arith.constant 0 : i32
    %c0_i32_1 = arith.constant 0 : i32
    return %c0_i32, %c0_i32_0 : i32, i32
  }
  func.func @transform_8(%arg0: i32) -> (i32, i32) {
    %c0_i32 = arith.constant 0 : i32
    %c0_i32_0 = arith.constant 0 : i32
    %c0_i32_1 = arith.constant 0 : i32
    return %c0_i32, %c0_i32_0 : i32, i32
  }
  func.func @transform_9(%arg0: i32) -> (i32, i32) {
    %c0_i32 = arith.constant 0 : i32
    %c0_i32_0 = arith.constant 0 : i32
    %c0_i32_1 = arith.constant 0 : i32
    return %c0_i32, %c0_i32_0 : i32, i32
  }
  func.func @transform_10(%arg0: i32) -> (i32, i32, i32) {
    %c0_i32 = arith.constant 0 : i32
    %c0_i32_0 = arith.constant 0 : i32
    %c0_i32_1 = arith.constant 0 : i32
    return %arg0, %c0_i32, %c0_i32_0 : i32, i32, i32
  }
}

</mosaic_0001>

<llo_original>
// kernel: tpu_custom_call.1
$region0: #{tpu_custom_call.1}
  #allocation0 [shape = 'u32[]', space=smem, size = 0x4, offset = 0x4, fixed_abs, tag = 'smem constant byte address 0x4 - core index']
  #allocation1 [shape = 'u32[144,128]{1,0:T(1,128)}', space=vmem, size = 0x12000, scoped, tag = 'internal scratch']
  %s0 = inlined_call_operand.vmem [shape: f32[2,64,17], index: 0, kind: input, shape index: {}]
  %s1 = inlined_call_operand.vmem [shape: f32[2,64,64], index: 1, kind: input, shape index: {}]
  %s2 = inlined_call_operand.vmem [shape: f32[17,128], index: 2, kind: input, shape index: {}]
  %s3 = inlined_call_operand.vmem [shape: f32[17,128], index: 3, kind: input, shape index: {}]
  %s4 = inlined_call_operand.vmem [shape: f32[16,128], index: 4, kind: input, shape index: {}]
  %s5 = inlined_call_operand.vmem [shape: f32[16,1], index: 5, kind: input, shape index: {}]
  %s6 = inlined_call_operand.vmem [shape: f32[256,64], index: 6, kind: input, shape index: {}]
  %s7 = inlined_call_operand.vmem [shape: f32[1,64], index: 7, kind: input, shape index: {}]
  %s8 = inlined_call_operand.vmem [shape: f32[8,64], index: 8, kind: input, shape index: {}]
  %s9 = inlined_call_operand.vmem [shape: f32[8,1], index: 9, kind: input, shape index: {}]
  %s10 = inlined_call_operand.hbm [shape: f32[2,8,64], index: 10, kind: output, shape index: {}]
  %s11 = sld [smem:[#allocation0]]
  $region73: #{tpu_custom_call.1} parent=0
    _
  %s13 = ssub.s32 1, %s11
  %s14 = scalar_select 0, %s13, %s11
  $region1: #{tpu_custom_call.1} parent=0
    #allocation2 [shape = 'u8[8192]{0}', space=vmem, size = 0x2000, scoped, tag = 'output window, operand 0']
    #allocation3 [shape = 's32[2]{0}', space=sflag, size = 0x8, scoped, tag = 'scoped memory for tpu_custom_call.1']
    %15 = vsyncpa [#allocation3], 0
    %s16 = scalar_lea.sflag [#allocation3], 1
    %17 = vsyncpa %s16, 0
    loop: start=0, step=1, limit=4
    $region2: #{tpu_custom_call.1} parent=1 // loop_pre_header
      _
    $region3: #{tpu_custom_call.1} parent=1 // loop_header
      %s19 = sphi 0, %s23
      %p20 = scmp.ge.s32.totalorder %s19, 4
      %s29 = sphi 0, %s31
      %s32 = sphi 0, %s29
      %s33 = sphi 0, %s32
      %s49 = sphi 0, %s33
      %s55 = sphi 0, %s57
      %s58 = sphi 0, %s55
      %s59 = sphi 0, %s58
      %s75 = sphi 0, %s59
      %s79 = sphi 0, %s79
      %s81 = sphi 0, %s79
      %s82 = sphi 0, %s81
      %s96 = sphi 0, %s82
      %s100 = sphi 0, %s100
      %s102 = sphi 0, %s100
      %s103 = sphi 0, %s102
      %s117 = sphi 0, %s103
      %s121 = sphi 0, %s121
      %s123 = sphi 0, %s121
      %s124 = sphi 0, %s123
      %s138 = sphi 0, %s124
      %s142 = sphi 0, %s142
      %s144 = sphi 0, %s142
      %s145 = sphi 0, %s144
      %s159 = sphi 0, %s145
      %s163 = sphi 0, %s163
      %s165 = sphi 0, %s163
      %s166 = sphi 0, %s165
      %s180 = sphi 0, %s166
      %s184 = sphi 0, %s184
      %s186 = sphi 0, %s184
      %s187 = sphi 0, %s186
      %s201 = sphi 0, %s187
      %s205 = sphi 0, %s205
      %s207 = sphi 0, %s205
      %s208 = sphi 0, %s207
      %s222 = sphi 0, %s208
      %s226 = sphi 0, %s226
      %s228 = sphi 0, %s226
      %s229 = sphi 0, %s228
      %s243 = sphi 0, %s229
      %s249 = sphi 0, %s251
      %s252 = sphi 0, %s249
      %s253 = sphi 0, %s252
      %s269 = sphi 0, %s253
    $region4: #{tpu_custom_call.1} parent=1 // loop_header_branch
      %22 = sbr.rel (%p20) target = $region8
    $region5: #{tpu_custom_call.1} parent=1 // loop_body
      %s24 = ssub.s32 %s19, 1
      %s25 = ssub.s32 %s19, 2
      %s26 = sadd.s32 %s19, 1
      %s27 = ssub.s32 %s19, %s26
      %p28 = scmp.eq.s32.totalorder %s27, 0
      %s30 = sadd.s32 %s29, 1
      %s31 = scalar_select %p28, %s29, %s30
      %p34 = pneg %p28
      %p35 = scmp.eq.s32.totalorder %s19, 1
      %p36 = por %p34, %p35
      %p37 = scmp.ne.s32.totalorder %s29, %s32
      %p38 = scmp.eq.s32.totalorder %s19, 0
      %p39 = por %p37, %p38
      %p40 = scmp.ne.s32.totalorder %s29, %s32
      %p41 = scmp.eq.s32.totalorder %s24, 1
      %p42 = por %p40, %p41
      %p43 = scmp.ne.s32.totalorder %s32, %s33
      %p44 = scmp.eq.s32.totalorder %s24, 0
      %p45 = por %p43, %p44
      %p46 = scmp.ne.s32.totalorder %s32, %s33
      %p47 = scmp.eq.s32.totalorder %s25, 1
      %p48 = por %p46, %p47
      %p50 = scmp.ne.s32.totalorder %s33, %s49
      %p51 = scmp.eq.s32.totalorder %s25, 0
      %p52 = por %p50, %p51
      %s53 = ssub.s32 %s19, %s26
      %p54 = scmp.eq.s32.totalorder %s53, 0
      %s56 = sadd.s32 %s55, 1
      %s57 = scalar_select %p54, %s55, %s56
      %p60 = pneg %p54
      %p61 = scmp.eq.s32.totalorder %s19, 1
      %p62 = por %p60, %p61
      %p63 = scmp.ne.s32.totalorder %s55, %s58
      %p64 = scmp.eq.s32.totalorder %s19, 0
      %p65 = por %p63, %p64
      %p66 = scmp.ne.s32.totalorder %s55, %s58
      %p67 = scmp.eq.s32.totalorder %s24, 1
      %p68 = por %p66, %p67
      %p69 = scmp.ne.s32.totalorder %s58, %s59
      %p70 = scmp.eq.s32.totalorder %s24, 0
      %p71 = por %p69, %p70
      %p72 = scmp.ne.s32.totalorder %s58, %s59
      %p73 = scmp.eq.s32.totalorder %s25, 1
      %p74 = por %p72, %p73
      %p76 = scmp.ne.s32.totalorder %s59, %s75
      %p77 = scmp.eq.s32.totalorder %s25, 0
      %p78 = por %p76, %p77
      %s80 = sadd.s32 %s79, 1
      %p83 = scmp.eq.s32.totalorder %s19, 1
      %p84 = scmp.ne.s32.totalorder %s79, %s81
      %p85 = scmp.eq.s32.totalorder %s19, 0
      %p86 = por %p84, %p85
      %p87 = scmp.ne.s32.totalorder %s79, %s81
      %p88 = scmp.eq.s32.totalorder %s24, 1
      %p89 = por %p87, %p88
      %p90 = scmp.ne.s32.totalorder %s81, %s82
      %p91 = scmp.eq.s32.totalorder %s24, 0
      %p92 = por %p90, %p91
      %p93 = scmp.ne.s32.totalorder %s81, %s82
      %p94 = scmp.eq.s32.totalorder %s25, 1
      %p95 = por %p93, %p94
      %p97 = scmp.ne.s32.totalorder %s82, %s96
      %p98 = scmp.eq.s32.totalorder %s25, 0
      %p99 = por %p97, %p98
      %s101 = sadd.s32 %s100, 1
      %p104 = scmp.eq.s32.totalorder %s19, 1
      %p105 = scmp.ne.s32.totalorder %s100, %s102
      %p106 = scmp.eq.s32.totalorder %s19, 0
      %p107 = por %p105, %p106
      %p108 = scmp.ne.s32.totalorder %s100, %s102
      %p109 = scmp.eq.s32.totalorder %s24, 1
      %p110 = por %p108, %p109
      %p111 = scmp.ne.s32.totalorder %s102, %s103
      %p112 = scmp.eq.s32.totalorder %s24, 0
      %p113 = por %p111, %p112
      %p114 = scmp.ne.s32.totalorder %s102, %s103
      %p115 = scmp.eq.s32.totalorder %s25, 1
      %p116 = por %p114, %p115
      %p118 = scmp.ne.s32.totalorder %s103, %s117
      %p119 = scmp.eq.s32.totalorder %s25, 0
      %p120 = por %p118, %p119
      %s122 = sadd.s32 %s121, 1
      %p125 = scmp.eq.s32.totalorder %s19, 1
      %p126 = scmp.ne.s32.totalorder %s121, %s123
      %p127 = scmp.eq.s32.totalorder %s19, 0
      %p128 = por %p126, %p127
      %p129 = scmp.ne.s32.totalorder %s121, %s123
      %p130 = scmp.eq.s32.totalorder %s24, 1
      %p131 = por %p129, %p130
      %p132 = scmp.ne.s32.totalorder %s123, %s124
      %p133 = scmp.eq.s32.totalorder %s24, 0
      %p134 = por %p132, %p133
      %p135 = scmp.ne.s32.totalorder %s123, %s124
      %p136 = scmp.eq.s32.totalorder %s25, 1
      %p137 = por %p135, %p136
      %p139 = scmp.ne.s32.totalorder %s124, %s138
      %p140 = scmp.eq.s32.totalorder %s25, 0
      %p141 = por %p139, %p140
      %s143 = sadd.s32 %s142, 1
      %p146 = scmp.eq.s32.totalorder %s19, 1
      %p147 = scmp.ne.s32.totalorder %s142, %s144
      %p148 = scmp.eq.s32.totalorder %s19, 0
      %p149 = por %p147, %p148
      %p150 = scmp.ne.s32.totalorder %s142, %s144
      %p151 = scmp.eq.s32.totalorder %s24, 1
      %p152 = por %p150, %p151
      %p153 = scmp.ne.s32.totalorder %s144, %s145
      %p154 = scmp.eq.s32.totalorder %s24, 0
      %p155 = por %p153, %p154
      %p156 = scmp.ne.s32.totalorder %s144, %s145
      %p157 = scmp.eq.s32.totalorder %s25, 1
      %p158 = por %p156, %p157
      %p160 = scmp.ne.s32.totalorder %s145, %s159
      %p161 = scmp.eq.s32.totalorder %s25, 0
      %p162 = por %p160, %p161
      %s164 = sadd.s32 %s163, 1
      %p167 = scmp.eq.s32.totalorder %s19, 1
      %p168 = scmp.ne.s32.totalorder %s163, %s165
      %p169 = scmp.eq.s32.totalorder %s19, 0
      %p170 = por %p168, %p169
      %p171 = scmp.ne.s32.totalorder %s163, %s165
      %p172 = scmp.eq.s32.totalorder %s24, 1
      %p173 = por %p171, %p172
      %p174 = scmp.ne.s32.totalorder %s165, %s166
      %p175 = scmp.eq.s32.totalorder %s24, 0
      %p176 = por %p174, %p175
      %p177 = scmp.ne.s32.totalorder %s165, %s166
      %p178 = scmp.eq.s32.totalorder %s25, 1
      %p179 = por %p177, %p178
      %p181 = scmp.ne.s32.totalorder %s166, %s180
      %p182 = scmp.eq.s32.totalorder %s25, 0
      %p183 = por %p181, %p182
      %s185 = sadd.s32 %s184, 1
      %p188 = scmp.eq.s32.totalorder %s19, 1
      %p189 = scmp.ne.s32.totalorder %s184, %s186
      %p190 = scmp.eq.s32.totalorder %s19, 0
      %p191 = por %p189, %p190
      %p192 = scmp.ne.s32.totalorder %s184, %s186
      %p193 = scmp.eq.s32.totalorder %s24, 1
      %p194 = por %p192, %p193
      %p195 = scmp.ne.s32.totalorder %s186, %s187
      %p196 = scmp.eq.s32.totalorder %s24, 0
      %p197 = por %p195, %p196
      %p198 = scmp.ne.s32.totalorder %s186, %s187
      %p199 = scmp.eq.s32.totalorder %s25, 1
      %p200 = por %p198, %p199
      %p202 = scmp.ne.s32.totalorder %s187, %s201
      %p203 = scmp.eq.s32.totalorder %s25, 0
      %p204 = por %p202, %p203
      %s206 = sadd.s32 %s205, 1
      %p209 = scmp.eq.s32.totalorder %s19, 1
      %p210 = scmp.ne.s32.totalorder %s205, %s207
      %p211 = scmp.eq.s32.totalorder %s19, 0
      %p212 = por %p210, %p211
      %p213 = scmp.ne.s32.totalorder %s205, %s207
      %p214 = scmp.eq.s32.totalorder %s24, 1
      %p215 = por %p213, %p214
      %p216 = scmp.ne.s32.totalorder %s207, %s208
      %p217 = scmp.eq.s32.totalorder %s24, 0
      %p218 = por %p216, %p217
      %p219 = scmp.ne.s32.totalorder %s207, %s208
      %p220 = scmp.eq.s32.totalorder %s25, 1
      %p221 = por %p219, %p220
      %p223 = scmp.ne.s32.totalorder %s208, %s222
      %p224 = scmp.eq.s32.totalorder %s25, 0
      %p225 = por %p223, %p224
      %s227 = sadd.s32 %s226, 1
      %p230 = scmp.eq.s32.totalorder %s19, 1
      %p231 = scmp.ne.s32.totalorder %s226, %s228
      %p232 = scmp.eq.s32.totalorder %s19, 0
      %p233 = por %p231, %p232
      %p234 = scmp.ne.s32.totalorder %s226, %s228
      %p235 = scmp.eq.s32.totalorder %s24, 1
      %p236 = por %p234, %p235
      %p237 = scmp.ne.s32.totalorder %s228, %s229
      %p238 = scmp.eq.s32.totalorder %s24, 0
      %p239 = por %p237, %p238
      %p240 = scmp.ne.s32.totalorder %s228, %s229
      %p241 = scmp.eq.s32.totalorder %s25, 1
      %p242 = por %p240, %p241
      %p244 = scmp.ne.s32.totalorder %s229, %s243
      %p245 = scmp.eq.s32.totalorder %s25, 0
      %p246 = por %p244, %p245
      %s247 = ssub.s32 %s19, %s26
      %p248 = scmp.eq.s32.totalorder %s247, 0
      %s250 = sadd.s32 %s249, 1
      %s251 = scalar_select %p248, %s249, %s250
      %p254 = pneg %p248
      %p255 = scmp.eq.s32.totalorder %s19, 1
      %p256 = por %p254, %p255
      %p257 = scmp.ne.s32.totalorder %s249, %s252
      %p258 = scmp.eq.s32.totalorder %s19, 0
      %p259 = por %p257, %p258
      %p260 = scmp.ne.s32.totalorder %s249, %s252
      %p261 = scmp.eq.s32.totalorder %s24, 1
      %p262 = por %p260, %p261
      %p263 = scmp.ne.s32.totalorder %s252, %s253
      %p264 = scmp.eq.s32.totalorder %s24, 0
      %p265 = por %p263, %p264
      %p266 = scmp.ne.s32.totalorder %s252, %s253
      %p267 = scmp.eq.s32.totalorder %s25, 1
      %p268 = por %p266, %p267
      %p270 = scmp.ne.s32.totalorder %s253, %s269
      %p271 = scmp.eq.s32.totalorder %s25, 0
      %p272 = por %p270, %p271
      %p273 = scmp.le.s32.totalorder 1, %s19
      %p274 = scmp.lt.s32.totalorder %s19, 3
      %p275 = pnand %p273, %p274
      %p276 = pneg %p275
      // Predicated region
      $region9: #{tpu_custom_call.1} parent=5 // pred_check
        _
      $region10: #{tpu_custom_call.1} parent=5 // pred_check_branch
        %278 = sbr.rel (%p275) target = $region12
      $region11: #{tpu_custom_call.1} parent=5 // pred_region
        %s279 = ssub.s32 %s19, 1
        // Predicated region
        $region13: #{tpu_custom_call.1} parent=11 // pred_check
          %p280 = pneg %p92
        $region14: #{tpu_custom_call.1} parent=11 // pred_check_branch
          %282 = sbr.rel (%p280) target = $region16
        $region15: #{tpu_custom_call.1} parent=11 // pred_region
          _
        $region16: #{tpu_custom_call.1} parent=11 // pred_fallthru
          _
        // Predicated region
        $region17: #{tpu_custom_call.1} parent=11 // pred_check
          %p283 = pneg %p113
        $region18: #{tpu_custom_call.1} parent=11 // pred_check_branch
          %285 = sbr.rel (%p283) target = $region20
        $region19: #{tpu_custom_call.1} parent=11 // pred_region
          _
        $region20: #{tpu_custom_call.1} parent=11 // pred_fallthru
          _
        // Predicated region
        $region21: #{tpu_custom_call.1} parent=11 // pred_check
          %p286 = pneg %p134
        $region22: #{tpu_custom_call.1} parent=11 // pred_check_branch
          %288 = sbr.rel (%p286) target = $region24
        $region23: #{tpu_custom_call.1} parent=11 // pred_region
          _
        $region24: #{tpu_custom_call.1} parent=11 // pred_fallthru
          _
        // Predicated region
        $region25: #{tpu_custom_call.1} parent=11 // pred_check
          %p289 = pneg %p155
        $region26: #{tpu_custom_call.1} parent=11 // pred_check_branch
          %291 = sbr.rel (%p289) target = $region28
        $region27: #{tpu_custom_call.1} parent=11 // pred_region
          _
        $region28: #{tpu_custom_call.1} parent=11 // pred_fallthru
          _
        // Predicated region
        $region29: #{tpu_custom_call.1} parent=11 // pred_check
          %p292 = pneg %p176
        $region30: #{tpu_custom_call.1} parent=11 // pred_check_branch
          %294 = sbr.rel (%p292) target = $region32
        $region31: #{tpu_custom_call.1} parent=11 // pred_region
          _
        $region32: #{tpu_custom_call.1} parent=11 // pred_fallthru
          _
        // Predicated region
        $region33: #{tpu_custom_call.1} parent=11 // pred_check
          %p295 = pneg %p197
        $region34: #{tpu_custom_call.1} parent=11 // pred_check_branch
          %297 = sbr.rel (%p295) target = $region36
        $region35: #{tpu_custom_call.1} parent=11 // pred_region
          _
        $region36: #{tpu_custom_call.1} parent=11 // pred_fallthru
          _
        // Predicated region
        $region37: #{tpu_custom_call.1} parent=11 // pred_check
          %p298 = pneg %p218
        $region38: #{tpu_custom_call.1} parent=11 // pred_check_branch
          %300 = sbr.rel (%p298) target = $region40
        $region39: #{tpu_custom_call.1} parent=11 // pred_region
          _
        $region40: #{tpu_custom_call.1} parent=11 // pred_fallthru
          _
        // Predicated region
        $region41: #{tpu_custom_call.1} parent=11 // pred_check
          %p301 = pneg %p239
        $region42: #{tpu_custom_call.1} parent=11 // pred_check_branch
          %303 = sbr.rel (%p301) target = $region44
        $region43: #{tpu_custom_call.1} parent=11 // pred_region
          _
        $region44: #{tpu_custom_call.1} parent=11 // pred_fallthru
          _
      $region12: #{tpu_custom_call.1} parent=5 // pred_fallthru
        _
      %p304 = scmp.lt.s32.totalorder %s19, 2
      // Predicated region
      $region45: #{tpu_custom_call.1} parent=5 // pred_check
        %p305 = pneg %p304
      $region46: #{tpu_custom_call.1} parent=5 // pred_check_branch
        %307 = sbr.rel (%p305) target = $region48
      $region47: #{tpu_custom_call.1} parent=5 // pred_region
        // Predicated region
        $region49: #{tpu_custom_call.1} parent=47 // pred_check
          %p308 = pneg %p39
        $region50: #{tpu_custom_call.1} parent=47 // pred_check_branch
          %310 = sbr.rel (%p308) target = $region52
        $region51: #{tpu_custom_call.1} parent=47 // pred_region
          %p311 = scmp.lt.s32.totalorder %s19, 1
          %s312 = scalar_select %p311, %s19, 1
          %s313 = smul.addr %s312, 8
          %s314 = smul.addr %s313, 8
          %s315 = scalar_lea.vmem %s0, %s314
        $region52: #{tpu_custom_call.1} parent=47 // pred_fallthru
          _
        // Predicated region
        $region53: #{tpu_custom_call.1} parent=47 // pred_check
          %p316 = pneg %p65
        $region54: #{tpu_custom_call.1} parent=47 // pred_check_branch
          %318 = sbr.rel (%p316) target = $region56
        $region55: #{tpu_custom_call.1} parent=47 // pred_region
          %p319 = scmp.lt.s32.totalorder %s19, 1
          %s320 = scalar_select %p319, %s19, 1
          %s321 = smul.addr %s320, 8
          %s322 = smul.addr %s321, 8
          %s323 = scalar_lea.vmem %s1, %s322
        $region56: #{tpu_custom_call.1} parent=47 // pred_fallthru
          _
      $region48: #{tpu_custom_call.1} parent=5 // pred_fallthru
        _
      %p324 = scmp.le.s32.totalorder 1, %s19
      %p325 = scmp.lt.s32.totalorder %s19, 3
      %p326 = pnand %p324, %p325
      %p327 = pneg %p326
      // Predicated region
      $region57: #{tpu_custom_call.1} parent=5 // pred_check
        _
      $region58: #{tpu_custom_call.1} parent=5 // pred_check_branch
        %329 = sbr.rel (%p326) target = $region60
      $region59: #{tpu_custom_call.1} parent=5 // pred_region
        %s330 = ssub.s32 %s19, 1
        %p331 = scmp.lt.s32.totalorder %s24, 1
        %s332 = scalar_select %p331, %s24, 1
        %s333 = smul.addr %s332, 8
        %s334 = smul.addr %s333, 8
        %s335 = scalar_lea.vmem %s0, %s334
        %p336 = pneg %p45
        %p337 = pneg %p42
        %p338 = scmp.lt.s32.totalorder %s24, 1
        %s339 = scalar_select %p338, %s24, 1
        %s340 = smul.addr %s339, 8
        %s341 = smul.addr %s340, 8
        %s342 = scalar_lea.vmem %s1, %s341
        %p343 = pneg %p71
        %p344 = pneg %p68
        %p345 = pneg %p92
        %p346 = pneg %p89
        %p347 = pneg %p113
        %p348 = pneg %p110
        %p349 = pneg %p134
        %p350 = pneg %p131
        %p351 = pneg %p155
        %p352 = pneg %p152
        %p353 = pneg %p176
        %p354 = pneg %p173
        %p355 = pneg %p197
        %p356 = pneg %p194
        %p357 = pneg %p218
        %p358 = pneg %p215
        %p359 = pneg %p239
        %p360 = pneg %p236
        %p361 = pneg %p265
        %p362 = pneg %p262
        %s363 = sand.u32 %s252, 1
        %s364 = scalar_lea.sflag [#allocation3], %s363
        %s365 = sand.u32 %s252, 1
        %s366 = smul.addr %s365, 8
        %s367 = scalar_lea.vmem [#allocation2], %s366
        %p368 = scmp.lt.s32.totalorder %s24, 1
        %s369 = scalar_select %p368, %s24, 1
        %s370 = smul.addr %s369, 8
        %s371 = smul.addr %s370, 8
        %s372 = scalar_lea.vmem %s0, %s371
        %p373 = scmp.lt.s32.totalorder %s24, 1
        %s374 = scalar_select %p373, %s24, 1
        %s375 = smul.addr %s374, 8
        %s376 = smul.addr %s375, 8
        %s377 = scalar_lea.vmem %s1, %s376
        %v378 = vld [vmem:[%s372] sm:$0xff]
        %v379 = vld [vmem:[%s372 + $0x8] sm:$0xff]
        %v380 = vld [vmem:[%s372 + $0x10] sm:$0xff]
        %v381 = vld [vmem:[%s372 + $0x18] sm:$0xff]
        %v382 = vld [vmem:[%s372 + $0x20] sm:$0xff]
        %v383 = vld [vmem:[%s372 + $0x28] sm:$0xff]
        %v384 = vld [vmem:[%s372 + $0x30] sm:$0xff]
        %v385 = vld [vmem:[%s372 + $0x38] sm:$0xff]
        %v386 = vld [vmem:[%s377] sm:$0xff]
        %v387 = vld [vmem:[%s377 + $0x8] sm:$0xff]
        %v388 = vld [vmem:[%s377 + $0x10] sm:$0xff]
        %v389 = vld [vmem:[%s377 + $0x18] sm:$0xff]
        %v390 = vld [vmem:[%s377 + $0x20] sm:$0xff]
        %v391 = vld [vmem:[%s377 + $0x28] sm:$0xff]
        %v392 = vld [vmem:[%s377 + $0x30] sm:$0xff]
        %v393 = vld [vmem:[%s377 + $0x38] sm:$0xff]
        %vm394 = vcmask 523264
        %v396 = vsel %vm394, %v386, 0
        %v399 = vsel %vm394, %v387, 0
        %v402 = vsel %vm394, %v388, 0
        %v405 = vsel %vm394, %v389, 0
        %v408 = vsel %vm394, %v390, 0
        %v411 = vsel %vm394, %v391, 0
        %v414 = vsel %vm394, %v392, 0
        %v417 = vsel %vm394, %v393, 0
        %419 = vmatprep.subr.mxu0 0.0
        %420 = vmatpush1.msra.mxu0 %v378
        %421 = vmatprep.subr.mxu0 0.0
        %422 = vmatpush1.msra.mxu0 %v379
        %423 = vmatprep.subr.mxu0 0.0
        %424 = vmatpush1.msra.mxu0 %v380
        %425 = vmatprep.subr.mxu0 0.0
        %426 = vmatpush1.msra.mxu0 %v381
        %427 = vmatprep.subr.mxu0 0.0
        %428 = vmatpush1.msra.mxu0 %v382
        %429 = vmatprep.subr.mxu0 0.0
        %430 = vmatpush1.msra.mxu0 %v383
        %431 = vmatprep.subr.mxu0 0.0
        %432 = vmatpush1.msra.mxu0 %v384
        %433 = vmatprep.subr.mxu0 0.0
        %434 = vmatpush1.msra.mxu0 %v385
        %435 = vmatprep.subr.mxu0 0.0
        %436 = vmatpush1.msra.mxu0 0.0
        %437 = vmatprep.subr.mxu0 0.0
        %438 = vmatpush1.msra.mxu0 0.0
        %439 = vmatprep.subr.mxu0 0.0
        %440 = vmatpush1.msra.mxu0 0.0
        %441 = vmatprep.subr.mxu0 0.0
        %442 = vmatpush1.msra.mxu0 0.0
        %443 = vmatprep.subr.mxu0 0.0
        %444 = vmatpush1.msra.mxu0 0.0
        %445 = vmatprep.subr.mxu0 0.0
        %446 = vmatpush1.msra.mxu0 0.0
        %447 = vmatprep.subr.mxu0 0.0
        %448 = vmatpush1.msra.mxu0 0.0
        %449 = vmatprep.subr.mxu0 0.0
        %450 = vmatpush1.msra.mxu0 0.0
        %451 = vmatprep.subr.mxu0 0.0
        %452 = vmatpush1.msra.mxu0 0.0
        %453 = vmatprep.subr.mxu0 0.0
        %454 = vmatpush1.msra.mxu0 0.0
        %455 = vmatprep.subr.mxu0 0.0
        %456 = vmatpush1.msra.mxu0 0.0
        %457 = vmatprep.subr.mxu0 0.0
        %458 = vmatpush1.msra.mxu0 0.0
        %459 = vmatprep.subr.mxu0 0.0
        %460 = vmatpush1.msra.mxu0 0.0
        %461 = vmatprep.subr.mxu0 0.0
        %462 = vmatpush1.msra.mxu0 0.0
        %463 = vmatprep.subr.mxu0 0.0
        %464 = vmatpush1.msra.mxu0 0.0
        %465 = vmatprep.subr.mxu0 0.0
        %466 = vmatpush1.msra.mxu0 0.0
        %467 = vmatprep.subr.mxu0 0.0
        %468 = vmatpush1.msra.mxu0 0.0
        %469 = vmatprep.subr.mxu0 0.0
        %470 = vmatpush1.msra.mxu0 0.0
        %471 = vmatprep.subr.mxu0 0.0
        %472 = vmatpush1.msra.mxu0 0.0
        %473 = vmatprep.subr.mxu0 0.0
        %474 = vmatpush1.msra.mxu0 0.0
        %475 = vmatprep.subr.mxu0 0.0
        %476 = vmatpush1.msra.mxu0 0.0
        %477 = vmatprep.subr.mxu0 0.0
        %478 = vmatpush1.msra.mxu0 0.0
        %479 = vmatprep.subr.mxu0 0.0
        %480 = vmatpush1.msra.mxu0 0.0
        %481 = vmatprep.subr.mxu0 0.0
        %482 = vmatpush1.msra.mxu0 0.0
        %483 = vmatprep.mubr.f32.mxu0 0.0
        %484 = vmatmul.mubr.f32.gmra.mrb[0].mxu0 %v396
        %v485 = vpop.f32.mrb[0].mxu0
        %v486 = vadd.f32 0.0, %v485
        %v487 = vpop.f32.mrb[0].mxu0
        %488 = vmatprep.mubr.f32.mxu0 0.0
        %489 = vmatmul.mubr.f32.gmra.mrb[0].mxu0 %v399
        %v490 = vpop.f32.mrb[0].mxu0
        %v491 = vadd.f32 0.0, %v490
        %v492 = vpop.f32.mrb[0].mxu0
        %493 = vmatprep.mubr.f32.mxu0 0.0
        %494 = vmatmul.mubr.f32.gmra.mrb[0].mxu0 %v402
        %v495 = vpop.f32.mrb[0].mxu0
        %v496 = vadd.f32 0.0, %v495
        %v497 = vpop.f32.mrb[0].mxu0
        %498 = vmatprep.mubr.f32.mxu0 0.0
        %499 = vmatmul.mubr.f32.gmra.mrb[0].mxu0 %v405
        %v500 = vpop.f32.mrb[0].mxu0
        %v501 = vadd.f32 0.0, %v500
        %v502 = vpop.f32.mrb[0].mxu0
        %503 = vmatprep.mubr.f32.mxu0 0.0
        %504 = vmatmul.mubr.f32.gmra.mrb[0].mxu0 %v408
        %v505 = vpop.f32.mrb[0].mxu0
        %v506 = vadd.f32 0.0, %v505
        %v507 = vpop.f32.mrb[0].mxu0
        %508 = vmatprep.mubr.f32.mxu0 0.0
        %509 = vmatmul.mubr.f32.gmra.mrb[0].mxu0 %v411
        %v510 = vpop.f32.mrb[0].mxu0
        %v511 = vadd.f32 0.0, %v510
        %v512 = vpop.f32.mrb[0].mxu0
        %513 = vmatprep.mubr.f32.mxu0 0.0
        %514 = vmatmul.mubr.f32.gmra.mrb[0].mxu0 %v414
        %v515 = vpop.f32.mrb[0].mxu0
        %v516 = vadd.f32 0.0, %v515
        %v517 = vpop.f32.mrb[0].mxu0
        %518 = vmatprep.mubr.f32.mxu0 0.0
        %519 = vmatmul.mubr.f32.gmra.mrb[0].mxu0 %v417
        %v520 = vpop.f32.mrb[0].mxu0
        %v521 = vadd.f32 0.0, %v520
        %v522 = vpop.f32.mrb[0].mxu0
        %523 = vdwg.mxu0
        %v524 = vmax.f32 %v486, 1.0
        %v525 = vmax.f32 %v491, 1.0
        %v526 = vmax.f32 %v496, 1.0
        %v527 = vmax.f32 %v501, 1.0
        %v528 = vmax.f32 %v506, 1.0
        %v529 = vmax.f32 %v511, 1.0
        %v530 = vmax.f32 %v516, 1.0
        %v531 = vmax.f32 %v521, 1.0
        %533 = vset.pattern.permute.xlu0 16
        %534 = vperm.xlu0 %533, %v524
        %v535 = vpop.permute.xlu0 %534
        %538 = vset.pattern.permute.xlu0 16
        %539 = vperm.xlu0 %538, %v525
        %v540 = vpop.permute.xlu0 %539
        %543 = vset.pattern.permute.xlu0 16
        %544 = vperm.xlu0 %543, %v526
        %v545 = vpop.permute.xlu0 %544
        %548 = vset.pattern.permute.xlu0 16
        %549 = vperm.xlu0 %548, %v527
        %v550 = vpop.permute.xlu0 %549
        %553 = vset.pattern.permute.xlu0 16
        %554 = vperm.xlu0 %553, %v528
        %v555 = vpop.permute.xlu0 %554
        %558 = vset.pattern.permute.xlu0 16
        %559 = vperm.xlu0 %558, %v529
        %v560 = vpop.permute.xlu0 %559
        %563 = vset.pattern.permute.xlu0 16
        %564 = vperm.xlu0 %563, %v530
        %v565 = vpop.permute.xlu0 %564
        %568 = vset.pattern.permute.xlu0 16
        %569 = vperm.xlu0 %568, %v531
        %v570 = vpop.permute.xlu0 %569
        %v572 = vrcp.pop %v535
        %v573 = vmul.f32 %v486, %v572
        %v574 = vrcp.pop %v540
        %v575 = vmul.f32 %v491, %v574
        %v576 = vrcp.pop %v545
        %v577 = vmul.f32 %v496, %v576
        %v578 = vrcp.pop %v550
        %v579 = vmul.f32 %v501, %v578
        %v580 = vrcp.pop %v555
        %v581 = vmul.f32 %v506, %v580
        %v582 = vrcp.pop %v560
        %v583 = vmul.f32 %v511, %v582
        %v584 = vrcp.pop %v565
        %v585 = vmul.f32 %v516, %v584
        %v586 = vrcp.pop %v570
        %v587 = vmul.f32 %v521, %v586
        %v588 = vld [vmem:[%s2] sm:$0xff]
        %v589 = vld [vmem:[%s2 + $0x8] sm:$0xff]
        %v590 = vld [vmem:[%s2 + $0x10] sm:$0x1]
        %v591 = vld [vmem:[%s3] sm:$0xff]
        %v592 = vld [vmem:[%s3 + $0x8] sm:$0xff]
        %v593 = vld [vmem:[%s3 + $0x10] sm:$0x1]
        %vm594 = vcmask 138240
        %v596 = vsel %vm594, %v378, 0
        %v599 = vsel %vm594, %v379, 0
        %v602 = vsel %vm594, %v380, 0
        %v605 = vsel %vm594, %v381, 0
        %v608 = vsel %vm594, %v382, 0
        %v611 = vsel %vm594, %v383, 0
        %v614 = vsel %vm594, %v384, 0
        %v617 = vsel %vm594, %v385, 0
        %vm619 = vcmask 1040384
        %v621 = vsel %vm619, %v593, 0
        %623 = vmatprep.subr.mxu0 0.0
        %624 = vmatpush1.msra.mxu0 %v591
        %625 = vmatprep.subr.mxu0 0.0
        %626 = vmatpush1.msra.mxu0 %v592
        %627 = vmatprep.subr.mxu0 0.0
        %628 = vmatpush1.msra.mxu0 %v621
        %629 = vmatprep.subr.mxu0 0.0
        %630 = vmatpush1.msra.mxu0 0.0
        %631 = vmatprep.subr.mxu0 0.0
        %632 = vmatpush1.msra.mxu0 0.0
        %633 = vmatprep.subr.mxu0 0.0
        %634 = vmatpush1.msra.mxu0 0.0
        %635 = vmatprep.subr.mxu0 0.0
        %636 = vmatpush1.msra.mxu0 0.0
        %637 = vmatprep.subr.mxu0 0.0
        %638 = vmatpush1.msra.mxu0 0.0
        %639 = vmatprep.subr.mxu0 0.0
        %640 = vmatpush1.msra.mxu0 0.0
        %641 = vmatprep.subr.mxu0 0.0
        %642 = vmatpush1.msra.mxu0 0.0
        %643 = vmatprep.subr.mxu0 0.0
        %644 = vmatpush1.msra.mxu0 0.0
        %645 = vmatprep.subr.mxu0 0.0
        %646 = vmatpush1.msra.mxu0 0.0
        %647 = vmatprep.subr.mxu0 0.0
        %648 = vmatpush1.msra.mxu0 0.0
        %649 = vmatprep.subr.mxu0 0.0
        %650 = vmatpush1.msra.mxu0 0.0
        %651 = vmatprep.subr.mxu0 0.0
        %652 = vmatpush1.msra.mxu0 0.0
        %653 = vmatprep.subr.mxu0 0.0
        %654 = vmatpush1.msra.mxu0 0.0
        %655 = vmatprep.subr.mxu0 0.0
        %656 = vmatpush1.msra.mxu0 0.0
        %657 = vmatprep.subr.mxu0 0.0
        %658 = vmatpush1.msra.mxu0 0.0
        %659 = vmatprep.subr.mxu0 0.0
        %660 = vmatpush1.msra.mxu0 0.0
        %661 = vmatprep.subr.mxu0 0.0
        %662 = vmatpush1.msra.mxu0 0.0
        %663 = vmatprep.subr.mxu0 0.0
        %664 = vmatpush1.msra.mxu0 0.0
        %665 = vmatprep.subr.mxu0 0.0
        %666 = vmatpush1.msra.mxu0 0.0
        %667 = vmatprep.subr.mxu0 0.0
        %668 = vmatpush1.msra.mxu0 0.0
        %669 = vmatprep.subr.mxu0 0.0
        %670 = vmatpush1.msra.mxu0 0.0
        %671 = vmatprep.subr.mxu0 0.0
        %672 = vmatpush1.msra.mxu0 0.0
        %673 = vmatprep.subr.mxu0 0.0
        %674 = vmatpush1.msra.mxu0 0.0
        %675 = vmatprep.subr.mxu0 0.0
        %676 = vmatpush1.msra.mxu0 0.0
        %677 = vmatprep.subr.mxu0 0.0
        %678 = vmatpush1.msra.mxu0 0.0
        %679 = vmatprep.subr.mxu0 0.0
        %680 = vmatpush1.msra.mxu0 0.0
        %681 = vmatprep.subr.mxu0 0.0
        %682 = vmatpush1.msra.mxu0 0.0
        %683 = vmatprep.subr.mxu0 0.0
        %684 = vmatpush1.msra.mxu0 0.0
        %685 = vmatprep.subr.mxu0 0.0
        %686 = vmatpush1.msra.mxu0 0.0
        %687 = vmatprep.mubr.f32.mxu0 0.0
        %688 = vmatmul.mubr.f32.gmra.mrb[0].mxu0 %v596
        %v689 = vpop.f32.mrb[0].mxu0
        %v690 = vadd.f32 0.0, %v689
        %v691 = vpop.f32.mrb[0].mxu0
        %692 = vmatprep.mubr.f32.mxu0 0.0
        %693 = vmatmul.mubr.f32.gmra.mrb[0].mxu0 %v599
        %v694 = vpop.f32.mrb[0].mxu0
        %v695 = vadd.f32 0.0, %v694
        %v696 = vpop.f32.mrb[0].mxu0
        %697 = vmatprep.mubr.f32.mxu0 0.0
        %698 = vmatmul.mubr.f32.gmra.mrb[0].mxu0 %v602
        %v699 = vpop.f32.mrb[0].mxu0
        %v700 = vadd.f32 0.0, %v699
        %v701 = vpop.f32.mrb[0].mxu0
        %702 = vmatprep.mubr.f32.mxu0 0.0
        %703 = vmatmul.mubr.f32.gmra.mrb[0].mxu0 %v605
        %v704 = vpop.f32.mrb[0].mxu0
        %v705 = vadd.f32 0.0, %v704
        %v706 = vpop.f32.mrb[0].mxu0
        %707 = vmatprep.mubr.f32.mxu0 0.0
        %708 = vmatmul.mubr.f32.gmra.mrb[0].mxu0 %v608
        %v709 = vpop.f32.mrb[0].mxu0
        %v710 = vadd.f32 0.0, %v709
        %v711 = vpop.f32.mrb[0].mxu0
        %712 = vmatprep.mubr.f32.mxu0 0.0
        %713 = vmatmul.mubr.f32.gmra.mrb[0].mxu0 %v611
        %v714 = vpop.f32.mrb[0].mxu0
        %v715 = vadd.f32 0.0, %v714
        %v716 = vpop.f32.mrb[0].mxu0
        %717 = vmatprep.mubr.f32.mxu0 0.0
        %718 = vmatmul.mubr.f32.gmra.mrb[0].mxu0 %v614
        %v719 = vpop.f32.mrb[0].mxu0
        %v720 = vadd.f32 0.0, %v719
        %v721 = vpop.f32.mrb[0].mxu0
        %722 = vmatprep.mubr.f32.mxu0 0.0
        %723 = vmatmul.mubr.f32.gmra.mrb[0].mxu0 %v617
        %v724 = vpop.f32.mrb[0].mxu0
        %v725 = vadd.f32 0.0, %v724
        %v726 = vpop.f32.mrb[0].mxu0
        %727 = vdwg.mxu0
        %v729 = vsel %vm594, %v573, 0
        %v732 = vsel %vm594, %v575, 0
        %v735 = vsel %vm594, %v577, 0
        %v738 = vsel %vm594, %v579, 0
        %v741 = vsel %vm594, %v581, 0
        %v744 = vsel %vm594, %v583, 0
        %v747 = vsel %vm594, %v585, 0
        %v750 = vsel %vm594, %v587, 0
        %v753 = vsel %vm619, %v590, 0
        %755 = vmatprep.subr.mxu0 0.0
        %756 = vmatpush1.msra.mxu0 %v588
        %757 = vmatprep.subr.mxu0 0.0
        %758 = vmatpush1.msra.mxu0 %v589
        %759 = vmatprep.subr.mxu0 0.0
        %760 = vmatpush1.msra.mxu0 %v753
        %761 = vmatprep.subr.mxu0 0.0
        %762 = vmatpush1.msra.mxu0 0.0
        %763 = vmatprep.subr.mxu0 0.0
        %764 = vmatpush1.msra.mxu0 0.0
        %765 = vmatprep.subr.mxu0 0.0
        %766 = vmatpush1.msra.mxu0 0.0
        %767 = vmatprep.subr.mxu0 0.0
        %768 = vmatpush1.msra.mxu0 0.0
        %769 = vmatprep.subr.mxu0 0.0
        %770 = vmatpush1.msra.mxu0 0.0
        %771 = vmatprep.subr.mxu0 0.0
        %772 = vmatpush1.msra.mxu0 0.0
        %773 = vmatprep.subr.mxu0 0.0
        %774 = vmatpush1.msra.mxu0 0.0
        %775 = vmatprep.subr.mxu0 0.0
        %776 = vmatpush1.msra.mxu0 0.0
        %777 = vmatprep.subr.mxu0 0.0
        %778 = vmatpush1.msra.mxu0 0.0
        %779 = vmatprep.subr.mxu0 0.0
        %780 = vmatpush1.msra.mxu0 0.0
        %781 = vmatprep.subr.mxu0 0.0
        %782 = vmatpush1.msra.mxu0 0.0
        %783 = vmatprep.subr.mxu0 0.0
        %784 = vmatpush1.msra.mxu0 0.0
        %785 = vmatprep.subr.mxu0 0.0
        %786 = vmatpush1.msra.mxu0 0.0
        %787 = vmatprep.subr.mxu0 0.0
        %788 = vmatpush1.msra.mxu0 0.0
        %789 = vmatprep.subr.mxu0 0.0
        %790 = vmatpush1.msra.mxu0 0.0
        %791 = vmatprep.subr.mxu0 0.0
        %792 = vmatpush1.msra.mxu0 0.0
        %793 = vmatprep.subr.mxu0 0.0
        %794 = vmatpush1.msra.mxu0 0.0
        %795 = vmatprep.subr.mxu0 0.0
        %796 = vmatpush1.msra.mxu0 0.0
        %797 = vmatprep.subr.mxu0 0.0
        %798 = vmatpush1.msra.mxu0 0.0
        %799 = vmatprep.subr.mxu0 0.0
        %800 = vmatpush1.msra.mxu0 0.0
        %801 = vmatprep.subr.mxu0 0.0
        %802 = vmatpush1.msra.mxu0 0.0
        %803 = vmatprep.subr.mxu0 0.0
        %804 = vmatpush1.msra.mxu0 0.0
        %805 = vmatprep.subr.mxu0 0.0
        %806 = vmatpush1.msra.mxu0 0.0
        %807 = vmatprep.subr.mxu0 0.0
        %808 = vmatpush1.msra.mxu0 0.0
        %809 = vmatprep.subr.mxu0 0.0
        %810 = vmatpush1.msra.mxu0 0.0
        %811 = vmatprep.subr.mxu0 0.0
        %812 = vmatpush1.msra.mxu0 0.0
        %813 = vmatprep.subr.mxu0 0.0
        %814 = vmatpush1.msra.mxu0 0.0
        %815 = vmatprep.subr.mxu0 0.0
        %816 = vmatpush1.msra.mxu0 0.0
        %817 = vmatprep.subr.mxu0 0.0
        %818 = vmatpush1.msra.mxu0 0.0
        %819 = vmatprep.mubr.f32.mxu0 0.0
        %820 = vmatmul.mubr.f32.gmra.mrb[0].mxu0 %v729
        %v821 = vpop.f32.mrb[0].mxu0
        %v822 = vadd.f32 %v690, %v821
        %v823 = vpop.f32.mrb[0].mxu0
        %824 = vmatprep.mubr.f32.mxu0 0.0
        %825 = vmatmul.mubr.f32.gmra.mrb[0].mxu0 %v732
        %v826 = vpop.f32.mrb[0].mxu0
        %v827 = vadd.f32 %v695, %v826
        %v828 = vpop.f32.mrb[0].mxu0
        %829 = vmatprep.mubr.f32.mxu0 0.0
        %830 = vmatmul.mubr.f32.gmra.mrb[0].mxu0 %v735
        %v831 = vpop.f32.mrb[0].mxu0
        %v832 = vadd.f32 %v700, %v831
        %v833 = vpop.f32.mrb[0].mxu0
        %834 = vmatprep.mubr.f32.mxu0 0.0
        %835 = vmatmul.mubr.f32.gmra.mrb[0].mxu0 %v738
        %v836 = vpop.f32.mrb[0].mxu0
        %v837 = vadd.f32 %v705, %v836
        %v838 = vpop.f32.mrb[0].mxu0
        %839 = vmatprep.mubr.f32.mxu0 0.0
        %840 = vmatmul.mubr.f32.gmra.mrb[0].mxu0 %v741
        %v841 = vpop.f32.mrb[0].mxu0
        %v842 = vadd.f32 %v710, %v841
        %v843 = vpop.f32.mrb[0].mxu0
        %844 = vmatprep.mubr.f32.mxu0 0.0
        %845 = vmatmul.mubr.f32.gmra.mrb[0].mxu0 %v744
        %v846 = vpop.f32.mrb[0].mxu0
        %v847 = vadd.f32 %v715, %v846
        %v848 = vpop.f32.mrb[0].mxu0
        %849 = vmatprep.mubr.f32.mxu0 0.0
        %850 = vmatmul.mubr.f32.gmra.mrb[0].mxu0 %v747
        %v851 = vpop.f32.mrb[0].mxu0
        %v852 = vadd.f32 %v720, %v851
        %v853 = vpop.f32.mrb[0].mxu0
        %854 = vmatprep.mubr.f32.mxu0 0.0
        %855 = vmatmul.mubr.f32.gmra.mrb[0].mxu0 %v750
        %v856 = vpop.f32.mrb[0].mxu0
        %v857 = vadd.f32 %v725, %v856
        %v858 = vpop.f32.mrb[0].mxu0
        %859 = vdwg.mxu0
        %v860 = vmax.f32 %v822, 0.0
        %v861 = vmax.f32 %v827, 0.0
        %v862 = vmax.f32 %v832, 0.0
        %v863 = vmax.f32 %v837, 0.0
        %v864 = vmax.f32 %v842, 0.0
        %v865 = vmax.f32 %v847, 0.0
        %v866 = vmax.f32 %v852, 0.0
        %v867 = vmax.f32 %v857, 0.0
        %v868 = vld [vmem:[%s4] sm:$0xff]
        %v869 = vld [vmem:[%s4 + $0x8] sm:$0xff]
        %v870 = vld [vmem:[%s5] sm:$0xff]
        %v871 = vld [vmem:[%s5 + $0x8] sm:$0xff]
        %873 = vset.pattern.permute.xlu0 0
        %874 = vperm.xlu0 %873, %v870
        %v875 = vpop.permute.xlu0 %874
        %878 = vset.pattern.permute.xlu0 0
        %879 = vperm.xlu0 %878, %v871
        %v880 = vpop.permute.xlu0 %879
        %882 = vmatprep.subr.mxu0 0.0
        %883 = vmatpush1.xpose.msra.mxu0 %v860
        %884 = vmatprep.subr.mxu0 0.0
        %885 = vmatpush1.xpose.msra.mxu0 %v861
        %886 = vmatprep.subr.mxu0 0.0
        %887 = vmatpush1.xpose.msra.mxu0 %v862
        %888 = vmatprep.subr.mxu0 0.0
        %889 = vmatpush1.xpose.msra.mxu0 %v863
        %890 = vmatprep.subr.mxu0 0.0
        %891 = vmatpush1.xpose.msra.mxu0 %v864
        %892 = vmatprep.subr.mxu0 0.0
        %893 = vmatpush1.xpose.msra.mxu0 %v865
        %894 = vmatprep.subr.mxu0 0.0
        %895 = vmatpush1.xpose.msra.mxu0 %v866
        %896 = vmatprep.subr.mxu0 0.0
        %897 = vmatpush1.xpose.msra.mxu0 %v867
        %898 = vmatprep.subr.mxu0 0.0
        %899 = vmatpush1.xpose.msra.mxu0 0.0
        %900 = vmatprep.subr.mxu0 0.0
        %901 = vmatpush1.xpose.msra.mxu0 0.0
        %902 = vmatprep.subr.mxu0 0.0
        %903 = vmatpush1.xpose.msra.mxu0 0.0
        %904 = vmatprep.subr.mxu0 0.0
        %905 = vmatpush1.xpose.msra.mxu0 0.0
        %906 = vmatprep.subr.mxu0 0.0
        %907 = vmatpush1.xpose.msra.mxu0 0.0
        %908 = vmatprep.subr.mxu0 0.0
        %909 = vmatpush1.xpose.msra.mxu0 0.0
        %910 = vmatprep.subr.mxu0 0.0
        %911 = vmatpush1.xpose.msra.mxu0 0.0
        %912 = vmatprep.subr.mxu0 0.0
        %913 = vmatpush1.xpose.msra.mxu0 0.0
        %914 = vmatprep.subr.mxu0 0.0
        %915 = vmatpush1.xpose.msra.mxu0 0.0
        %916 = vmatprep.subr.mxu0 0.0
        %917 = vmatpush1.xpose.msra.mxu0 0.0
        %918 = vmatprep.subr.mxu0 0.0
        %919 = vmatpush1.xpose.msra.mxu0 0.0
        %920 = vmatprep.subr.mxu0 0.0
        %921 = vmatpush1.xpose.msra.mxu0 0.0
        %922 = vmatprep.subr.mxu0 0.0
        %923 = vmatpush1.xpose.msra.mxu0 0.0
        %924 = vmatprep.subr.mxu0 0.0
        %925 = vmatpush1.xpose.msra.mxu0 0.0
        %926 = vmatprep.subr.mxu0 0.0
        %927 = vmatpush1.xpose.msra.mxu0 0.0
        %928 = vmatprep.subr.mxu0 0.0
        %929 = vmatpush1.xpose.msra.mxu0 0.0
        %930 = vmatprep.subr.mxu0 0.0
        %931 = vmatpush1.xpose.msra.mxu0 0.0
        %932 = vmatprep.subr.mxu0 0.0
        %933 = vmatpush1.xpose.msra.mxu0 0.0
        %934 = vmatprep.subr.mxu0 0.0
        %935 = vmatpush1.xpose.msra.mxu0 0.0
        %936 = vmatprep.subr.mxu0 0.0
        %937 = vmatpush1.xpose.msra.mxu0 0.0
        %938 = vmatprep.subr.mxu0 0.0
        %939 = vmatpush1.xpose.msra.mxu0 0.0
        %940 = vmatprep.subr.mxu0 0.0
        %941 = vmatpush1.xpose.msra.mxu0 0.0
        %942 = vmatprep.subr.mxu0 0.0
        %943 = vmatpush1.xpose.msra.mxu0 0.0
        %944 = vmatprep.subr.mxu0 0.0
        %945 = vmatpush1.xpose.msra.mxu0 0.0
        %946 = vmatprep.mubr.f32.mxu0 0.0
        %947 = vmatmul.mubr.f32.gmra.mrb[0].mxu0 %v868
        %v948 = vpop.f32.mrb[0].mxu0
        %v949 = vadd.f32 %v875, %v948
        %v950 = vpop.f32.mrb[0].mxu0
        %951 = vmatprep.mubr.f32.mxu0 0.0
        %952 = vmatmul.mubr.f32.gmra.mrb[0].mxu0 %v869
        %v953 = vpop.f32.mrb[0].mxu0
        %v954 = vadd.f32 %v880, %v953
        %v955 = vpop.f32.mrb[0].mxu0
        %956 = vdwg.mxu0
        %v957 = vsel %vm394, %v949, -inf
        %958 = vmax.xlane.f32.xlu0 %v957
        %v959 = vpop.xlane.xlu0 %958
        %v960 = vsel %vm394, %v954, -inf
        %961 = vmax.xlane.f32.xlu0 %v960
        %v962 = vpop.xlane.xlu0 %961
        %v963 = vsub.f32 %v949, %v959
        %v964 = vsub.f32 %v954, %v962
        %v965 = vmul.f32 %v963, 1.442695
        %v966 = vpow.pop %v965
        %v967 = vmul.f32 %v964, 1.442695
        %v968 = vpow.pop %v967
        %v969 = vsel %vm394, %v966, 0.0
        %970 = vadd.xlane.f32.xlu0 %v969
        %v971 = vpop.xlane.xlu0 %970
        %v972 = vsel %vm394, %v968, 0.0
        %973 = vadd.xlane.f32.xlu0 %v972
        %v974 = vpop.xlane.xlu0 %973
        %v975 = vrcp.pop %v971
        %v976 = vmul.f32 %v966, %v975
        %v977 = vrcp.pop %v974
        %v978 = vmul.f32 %v968, %v977
        %v979 = vsel %vm394, %v976, -inf
        %v980 = vsel %vm394, %v978, -inf
        %v981 = vmax.f32 %v979, %v980
        %v982 = vrot.slane %v981, 4
        %v983 = vmax.f32 %v981, %v982
        %v984 = vrot.slane %v983, 2
        %v985 = vmax.f32 %v983, %v984
        %v986 = vrot.slane %v985, 1
        %v987 = vmax.f32 %v985, %v986
        %v988 = vsub.f32 %v976, %v987
        %v989 = vsub.f32 %v978, %v987
        %v990 = vmul.f32 %v988, 1.442695
        %v991 = vpow.pop %v990
        %v992 = vmul.f32 %v989, 1.442695
        %v993 = vpow.pop %v992
        %v994 = vsel %vm394, %v991, 0.0
        %v995 = vsel %vm394, %v993, 0.0
        %v996 = vadd.f32 %v994, %v995
        %v997 = vrot.slane %v996, 4
        %v998 = vadd.f32 %v996, %v997
        %v999 = vrot.slane %v998, 2
        %v1000 = vadd.f32 %v998, %v999
        %v1001 = vrot.slane %v1000, 1
        %v1002 = vadd.f32 %v1000, %v1001
        %v1003 = vrcp.pop %v1002
        %v1004 = vmul.f32 %v991, %v1003
        %v1005 = vmul.f32 %v993, %v1003
        %v1007 = vsel %vm394, %v1004, 0
        %v1010 = vsel %vm394, %v1005, 0
        %1012 = vmatprep.subr.mxu0 0.0
        %1013 = vmatpush1.msra.mxu0 %v860
        %1014 = vmatprep.subr.mxu0 0.0
        %1015 = vmatpush1.msra.mxu0 %v861
        %1016 = vmatprep.subr.mxu0 0.0
        %1017 = vmatpush1.msra.mxu0 %v862
        %1018 = vmatprep.subr.mxu0 0.0
        %1019 = vmatpush1.msra.mxu0 %v863
        %1020 = vmatprep.subr.mxu0 0.0
        %1021 = vmatpush1.msra.mxu0 %v864
        %1022 = vmatprep.subr.mxu0 0.0
        %1023 = vmatpush1.msra.mxu0 %v865
        %1024 = vmatprep.subr.mxu0 0.0
        %1025 = vmatpush1.msra.mxu0 %v866
        %1026 = vmatprep.subr.mxu0 0.0
        %1027 = vmatpush1.msra.mxu0 %v867
        %1028 = vmatprep.subr.mxu0 0.0
        %1029 = vmatpush1.msra.mxu0 0.0
        %1030 = vmatprep.subr.mxu0 0.0
        %1031 = vmatpush1.msra.mxu0 0.0
        %1032 = vmatprep.subr.mxu0 0.0
        %1033 = vmatpush1.msra.mxu0 0.0
        %1034 = vmatprep.subr.mxu0 0.0
        %1035 = vmatpush1.msra.mxu0 0.0
        %1036 = vmatprep.subr.mxu0 0.0
        %1037 = vmatpush1.msra.mxu0 0.0
        %1038 = vmatprep.subr.mxu0 0.0
        %1039 = vmatpush1.msra.mxu0 0.0
        %1040 = vmatprep.subr.mxu0 0.0
        %1041 = vmatpush1.msra.mxu0 0.0
        %1042 = vmatprep.subr.mxu0 0.0
        %1043 = vmatpush1.msra.mxu0 0.0
        %1044 = vmatprep.subr.mxu0 0.0
        %1045 = vmatpush1.msra.mxu0 0.0
        %1046 = vmatprep.subr.mxu0 0.0
        %1047 = vmatpush1.msra.mxu0 0.0
        %1048 = vmatprep.subr.mxu0 0.0
        %1049 = vmatpush1.msra.mxu0 0.0
        %1050 = vmatprep.subr.mxu0 0.0
        %1051 = vmatpush1.msra.mxu0 0.0
        %1052 = vmatprep.subr.mxu0 0.0
        %1053 = vmatpush1.msra.mxu0 0.0
        %1054 = vmatprep.subr.mxu0 0.0
        %1055 = vmatpush1.msra.mxu0 0.0
        %1056 = vmatprep.subr.mxu0 0.0
        %1057 = vmatpush1.msra.mxu0 0.0
        %1058 = vmatprep.subr.mxu0 0.0
        %1059 = vmatpush1.msra.mxu0 0.0
        %1060 = vmatprep.subr.mxu0 0.0
        %1061 = vmatpush1.msra.mxu0 0.0
        %1062 = vmatprep.subr.mxu0 0.0
        %1063 = vmatpush1.msra.mxu0 0.0
        %1064 = vmatprep.subr.mxu0 0.0
        %1065 = vmatpush1.msra.mxu0 0.0
        %1066 = vmatprep.subr.mxu0 0.0
        %1067 = vmatpush1.msra.mxu0 0.0
        %1068 = vmatprep.subr.mxu0 0.0
        %1069 = vmatpush1.msra.mxu0 0.0
        %1070 = vmatprep.subr.mxu0 0.0
        %1071 = vmatpush1.msra.mxu0 0.0
        %1072 = vmatprep.subr.mxu0 0.0
        %1073 = vmatpush1.msra.mxu0 0.0
        %1074 = vmatprep.subr.mxu0 0.0
        %1075 = vmatpush1.msra.mxu0 0.0
        %1076 = vmatprep.mubr.f32.mxu0 0.0
        %1077 = vmatmul.mubr.f32.gmra.mrb[0].mxu0 %v1007
        %v1078 = vpop.f32.mrb[0].mxu0
        %v1079 = vadd.f32 0.0, %v1078
        %v1080 = vpop.f32.mrb[0].mxu0
        %1081 = vmatprep.mubr.f32.mxu0 0.0
        %1082 = vmatmul.mubr.f32.gmra.mrb[0].mxu0 %v1010
        %v1083 = vpop.f32.mrb[0].mxu0
        %v1084 = vadd.f32 0.0, %v1083
        %v1085 = vpop.f32.mrb[0].mxu0
        %1086 = vdwg.mxu0
        %1087 = vmatprep.subr.mxu0 0.0
        %1088 = vmatpush1.msra.mxu0 %v386
        %1089 = vmatprep.subr.mxu0 0.0
        %1090 = vmatpush1.msra.mxu0 %v387
        %1091 = vmatprep.subr.mxu0 0.0
        %1092 = vmatpush1.msra.mxu0 %v388
        %1093 = vmatprep.subr.mxu0 0.0
        %1094 = vmatpush1.msra.mxu0 %v389
        %1095 = vmatprep.subr.mxu0 0.0
        %1096 = vmatpush1.msra.mxu0 %v390
        %1097 = vmatprep.subr.mxu0 0.0
        %1098 = vmatpush1.msra.mxu0 %v391
        %1099 = vmatprep.subr.mxu0 0.0
        %1100 = vmatpush1.msra.mxu0 %v392
        %1101 = vmatprep.subr.mxu0 0.0
        %1102 = vmatpush1.msra.mxu0 %v393
        %1103 = vmatprep.subr.mxu0 0.0
        %1104 = vmatpush1.msra.mxu0 0.0
        %1105 = vmatprep.subr.mxu0 0.0
        %1106 = vmatpush1.msra.mxu0 0.0
        %1107 = vmatprep.subr.mxu0 0.0
        %1108 = vmatpush1.msra.mxu0 0.0
        %1109 = vmatprep.subr.mxu0 0.0
        %1110 = vmatpush1.msra.mxu0 0.0
        %1111 = vmatprep.subr.mxu0 0.0
        %1112 = vmatpush1.msra.mxu0 0.0
        %1113 = vmatprep.subr.mxu0 0.0
        %1114 = vmatpush1.msra.mxu0 0.0
        %1115 = vmatprep.subr.mxu0 0.0
        %1116 = vmatpush1.msra.mxu0 0.0
        %1117 = vmatprep.subr.mxu0 0.0
        %1118 = vmatpush1.msra.mxu0 0.0
        %1119 = vmatprep.subr.mxu0 0.0
        %1120 = vmatpush1.msra.mxu0 0.0
        %1121 = vmatprep.subr.mxu0 0.0
        %1122 = vmatpush1.msra.mxu0 0.0
        %1123 = vmatprep.subr.mxu0 0.0
        %1124 = vmatpush1.msra.mxu0 0.0
        %1125 = vmatprep.subr.mxu0 0.0
        %1126 = vmatpush1.msra.mxu0 0.0
        %1127 = vmatprep.subr.mxu0 0.0
        %1128 = vmatpush1.msra.mxu0 0.0
        %1129 = vmatprep.subr.mxu0 0.0
        %1130 = vmatpush1.msra.mxu0 0.0
        %1131 = vmatprep.subr.mxu0 0.0
        %1132 = vmatpush1.msra.mxu0 0.0
        %1133 = vmatprep.subr.mxu0 0.0
        %1134 = vmatpush1.msra.mxu0 0.0
        %1135 = vmatprep.subr.mxu0 0.0
        %1136 = vmatpush1.msra.mxu0 0.0
        %1137 = vmatprep.subr.mxu0 0.0
        %1138 = vmatpush1.msra.mxu0 0.0
        %1139 = vmatprep.subr.mxu0 0.0
        %1140 = vmatpush1.msra.mxu0 0.0
        %1141 = vmatprep.subr.mxu0 0.0
        %1142 = vmatpush1.msra.mxu0 0.0
        %1143 = vmatprep.subr.mxu0 0.0
        %1144 = vmatpush1.msra.mxu0 0.0
        %1145 = vmatprep.subr.mxu0 0.0
        %1146 = vmatpush1.msra.mxu0 0.0
        %1147 = vmatprep.subr.mxu0 0.0
        %1148 = vmatpush1.msra.mxu0 0.0
        %1149 = vmatprep.subr.mxu0 0.0
        %1150 = vmatpush1.msra.mxu0 0.0
        %1151 = vmatprep.mubr.f32.mxu0 0.0
        %1152 = vmatmul.mubr.f32.gmra.mrb[0].mxu0 %v1007
        %v1153 = vpop.f32.mrb[0].mxu0
        %v1154 = vadd.f32 0.0, %v1153
        %v1155 = vpop.f32.mrb[0].mxu0
        %1156 = vmatprep.mubr.f32.mxu0 0.0
        %1157 = vmatmul.mubr.f32.gmra.mrb[0].mxu0 %v1010
        %v1158 = vpop.f32.mrb[0].mxu0
        %v1159 = vadd.f32 0.0, %v1158
        %v1160 = vpop.f32.mrb[0].mxu0
        %1161 = vdwg.mxu0
        %v1163 = vsel %vm394, %v1154, 0
        %v1166 = vsel %vm394, %v1159, 0
        %1168 = vmatprep.subr.mxu0 0.0
        %1169 = vmatpush1.xpose.msra.mxu0 %v1007
        %1170 = vmatprep.subr.mxu0 0.0
        %1171 = vmatpush1.xpose.msra.mxu0 %v1010
        %1172 = vmatprep.subr.mxu0 0.0
        %1173 = vmatpush1.xpose.msra.mxu0 0.0
        %1174 = vmatprep.subr.mxu0 0.0
        %1175 = vmatpush1.xpose.msra.mxu0 0.0
        %1176 = vmatprep.subr.mxu0 0.0
        %1177 = vmatpush1.xpose.msra.mxu0 0.0
        %1178 = vmatprep.subr.mxu0 0.0
        %1179 = vmatpush1.xpose.msra.mxu0 0.0
        %1180 = vmatprep.subr.mxu0 0.0
        %1181 = vmatpush1.xpose.msra.mxu0 0.0
        %1182 = vmatprep.subr.mxu0 0.0
        %1183 = vmatpush1.xpose.msra.mxu0 0.0
        %1184 = vmatprep.subr.mxu0 0.0
        %1185 = vmatpush1.xpose.msra.mxu0 0.0
        %1186 = vmatprep.subr.mxu0 0.0
        %1187 = vmatpush1.xpose.msra.mxu0 0.0
        %1188 = vmatprep.subr.mxu0 0.0
        %1189 = vmatpush1.xpose.msra.mxu0 0.0
        %1190 = vmatprep.subr.mxu0 0.0
        %1191 = vmatpush1.xpose.msra.mxu0 0.0
        %1192 = vmatprep.subr.mxu0 0.0
        %1193 = vmatpush1.xpose.msra.mxu0 0.0
        %1194 = vmatprep.subr.mxu0 0.0
        %1195 = vmatpush1.xpose.msra.mxu0 0.0
        %1196 = vmatprep.subr.mxu0 0.0
        %1197 = vmatpush1.xpose.msra.mxu0 0.0
        %1198 = vmatprep.subr.mxu0 0.0
        %1199 = vmatpush1.xpose.msra.mxu0 0.0
        %1200 = vmatprep.subr.mxu0 0.0
        %1201 = vmatpush1.xpose.msra.mxu0 0.0
        %1202 = vmatprep.subr.mxu0 0.0
        %1203 = vmatpush1.xpose.msra.mxu0 0.0
        %1204 = vmatprep.subr.mxu0 0.0
        %1205 = vmatpush1.xpose.msra.mxu0 0.0
        %1206 = vmatprep.subr.mxu0 0.0
        %1207 = vmatpush1.xpose.msra.mxu0 0.0
        %1208 = vmatprep.subr.mxu0 0.0
        %1209 = vmatpush1.xpose.msra.mxu0 0.0
        %1210 = vmatprep.subr.mxu0 0.0
        %1211 = vmatpush1.xpose.msra.mxu0 0.0
        %1212 = vmatprep.subr.mxu0 0.0
        %1213 = vmatpush1.xpose.msra.mxu0 0.0
        %1214 = vmatprep.subr.mxu0 0.0
        %1215 = vmatpush1.xpose.msra.mxu0 0.0
        %1216 = vmatprep.subr.mxu0 0.0
        %1217 = vmatpush1.xpose.msra.mxu0 0.0
        %1218 = vmatprep.subr.mxu0 0.0
        %1219 = vmatpush1.xpose.msra.mxu0 0.0
        %1220 = vmatprep.subr.mxu0 0.0
        %1221 = vmatpush1.xpose.msra.mxu0 0.0
        %1222 = vmatprep.subr.mxu0 0.0
        %1223 = vmatpush1.xpose.msra.mxu0 0.0
        %1224 = vmatprep.subr.mxu0 0.0
        %1225 = vmatpush1.xpose.msra.mxu0 0.0
        %1226 = vmatprep.subr.mxu0 0.0
        %1227 = vmatpush1.xpose.msra.mxu0 0.0
        %1228 = vmatprep.subr.mxu0 0.0
        %1229 = vmatpush1.xpose.msra.mxu0 0.0
        %1230 = vmatprep.subr.mxu0 0.0
        %1231 = vmatpush1.xpose.msra.mxu0 0.0
        %1232 = vmatprep.mubr.f32.mxu0 0.0
        %1233 = vmatmul.mubr.f32.gmra.mrb[0].mxu0 %v1163
        %v1234 = vpop.f32.mrb[0].mxu0
        %v1235 = vadd.f32 0.0, %v1234
        %v1236 = vpop.f32.mrb[0].mxu0
        %1237 = vmatprep.mubr.f32.mxu0 0.0
        %1238 = vmatmul.mubr.f32.gmra.mrb[0].mxu0 %v1166
        %v1239 = vpop.f32.mrb[0].mxu0
        %v1240 = vadd.f32 0.0, %v1239
        %v1241 = vpop.f32.mrb[0].mxu0
        %1242 = vdwg.mxu0
        %vm1243 = vcmask 130048
        %v1245 = vsel %vm1243, %v1235, 0
        %v1248 = vsel %vm1243, %v1240, 0
        %1250 = vmatprep.subr.mxu0 0.0
        %1251 = vmatpush1.msra.mxu0 %v1079
        %1252 = vmatprep.subr.mxu0 0.0
        %1253 = vmatpush1.msra.mxu0 %v1084
        %1254 = vmatprep.subr.mxu0 0.0
        %1255 = vmatpush1.msra.mxu0 0.0
        %1256 = vmatprep.subr.mxu0 0.0
        %1257 = vmatpush1.msra.mxu0 0.0
        %1258 = vmatprep.subr.mxu0 0.0
        %1259 = vmatpush1.msra.mxu0 0.0
        %1260 = vmatprep.subr.mxu0 0.0
        %1261 = vmatpush1.msra.mxu0 0.0
        %1262 = vmatprep.subr.mxu0 0.0
        %1263 = vmatpush1.msra.mxu0 0.0
        %1264 = vmatprep.subr.mxu0 0.0
        %1265 = vmatpush1.msra.mxu0 0.0
        %1266 = vmatprep.subr.mxu0 0.0
        %1267 = vmatpush1.msra.mxu0 0.0
        %1268 = vmatprep.subr.mxu0 0.0
        %1269 = vmatpush1.msra.mxu0 0.0
        %1270 = vmatprep.subr.mxu0 0.0
        %1271 = vmatpush1.msra.mxu0 0.0
        %1272 = vmatprep.subr.mxu0 0.0
        %1273 = vmatpush1.msra.mxu0 0.0
        %1274 = vmatprep.subr.mxu0 0.0
        %1275 = vmatpush1.msra.mxu0 0.0
        %1276 = vmatprep.subr.mxu0 0.0
        %1277 = vmatpush1.msra.mxu0 0.0
        %1278 = vmatprep.subr.mxu0 0.0
        %1279 = vmatpush1.msra.mxu0 0.0
        %1280 = vmatprep.subr.mxu0 0.0
        %1281 = vmatpush1.msra.mxu0 0.0
        %1282 = vmatprep.subr.mxu0 0.0
        %1283 = vmatpush1.msra.mxu0 0.0
        %1284 = vmatprep.subr.mxu0 0.0
        %1285 = vmatpush1.msra.mxu0 0.0
        %1286 = vmatprep.subr.mxu0 0.0
        %1287 = vmatpush1.msra.mxu0 0.0
        %1288 = vmatprep.subr.mxu0 0.0
        %1289 = vmatpush1.msra.mxu0 0.0
        %1290 = vmatprep.subr.mxu0 0.0
        %1291 = vmatpush1.msra.mxu0 0.0
        %1292 = vmatprep.subr.mxu0 0.0
        %1293 = vmatpush1.msra.mxu0 0.0
        %1294 = vmatprep.subr.mxu0 0.0
        %1295 = vmatpush1.msra.mxu0 0.0
        %1296 = vmatprep.subr.mxu0 0.0
        %1297 = vmatpush1.msra.mxu0 0.0
        %1298 = vmatprep.subr.mxu0 0.0
        %1299 = vmatpush1.msra.mxu0 0.0
        %1300 = vmatprep.subr.mxu0 0.0
        %1301 = vmatpush1.msra.mxu0 0.0
        %1302 = vmatprep.subr.mxu0 0.0
        %1303 = vmatpush1.msra.mxu0 0.0
        %1304 = vmatprep.subr.mxu0 0.0
        %1305 = vmatpush1.msra.mxu0 0.0
        %1306 = vmatprep.subr.mxu0 0.0
        %1307 = vmatpush1.msra.mxu0 0.0
        %1308 = vmatprep.subr.mxu0 0.0
        %1309 = vmatpush1.msra.mxu0 0.0
        %1310 = vmatprep.subr.mxu0 0.0
        %1311 = vmatpush1.msra.mxu0 0.0
        %1312 = vmatprep.subr.mxu0 0.0
        %1313 = vmatpush1.msra.mxu0 0.0
        %1314 = vmatprep.mubr.f32.mxu0 0.0
        %1315 = vmatmul.mubr.f32.gmra.mrb[0].mxu0 %v1245
        %v1316 = vpop.f32.mrb[0].mxu0
        %v1317 = vadd.f32 0.0, %v1316
        %v1318 = vpop.f32.mrb[0].mxu0
        %1319 = vmatprep.mubr.f32.mxu0 0.0
        %1320 = vmatmul.mubr.f32.gmra.mrb[0].mxu0 %v1248
        %v1321 = vpop.f32.mrb[0].mxu0
        %v1322 = vadd.f32 0.0, %v1321
        %v1323 = vpop.f32.mrb[0].mxu0
        %1324 = vdwg.mxu0
        %v1325 = vsel %vm1243, %v1235, 0.0
        %1326 = vadd.xlane.f32.xlu0 %v1325
        %v1327 = vpop.xlane.xlu0 %1326
        %v1328 = vsel %vm1243, %v1240, 0.0
        %1329 = vadd.xlane.f32.xlu0 %v1328
        %v1330 = vpop.xlane.xlu0 %1329
        %v1331 = vmax.f32 %v1327, 1.0
        %v1332 = vmax.f32 %v1330, 1.0
        %v1333 = vrcp.pop %v1331
        %v1334 = vmul.f32 %v1317, %v1333
        %v1335 = vrcp.pop %v1332
        %v1336 = vmul.f32 %v1322, %v1335
        %v1337 = vld [vmem:[%s6] sm:$0xff]
        %v1338 = vld [vmem:[%s6 + $0x8] sm:$0xff]
        %v1339 = vld [vmem:[%s6 + $0x10] sm:$0xff]
        %v1340 = vld [vmem:[%s6 + $0x18] sm:$0xff]
        %v1341 = vld [vmem:[%s6 + $0x20] sm:$0xff]
        %v1342 = vld [vmem:[%s6 + $0x28] sm:$0xff]
        %v1343 = vld [vmem:[%s6 + $0x30] sm:$0xff]
        %v1344 = vld [vmem:[%s6 + $0x38] sm:$0xff]
        %v1345 = vld [vmem:[%s6 + $0x40] sm:$0xff]
        %v1346 = vld [vmem:[%s6 + $0x48] sm:$0xff]
        %v1347 = vld [vmem:[%s6 + $0x50] sm:$0xff]
        %v1348 = vld [vmem:[%s6 + $0x58] sm:$0xff]
        %v1349 = vld [vmem:[%s6 + $0x60] sm:$0xff]
        %v1350 = vld [vmem:[%s6 + $0x68] sm:$0xff]
        %v1351 = vld [vmem:[%s6 + $0x70] sm:$0xff]
        %v1352 = vld [vmem:[%s6 + $0x78] sm:$0xff]
        %v1353 = vld [vmem:[%s6 + $0x80] sm:$0xff]
        %v1354 = vld [vmem:[%s6 + $0x88] sm:$0xff]
        %v1355 = vld [vmem:[%s6 + $0x90] sm:$0xff]
        %v1356 = vld [vmem:[%s6 + $0x98] sm:$0xff]
        %v1357 = vld [vmem:[%s6 + $0xa0] sm:$0xff]
        %v1358 = vld [vmem:[%s6 + $0xa8] sm:$0xff]
        %v1359 = vld [vmem:[%s6 + $0xb0] sm:$0xff]
        %v1360 = vld [vmem:[%s6 + $0xb8] sm:$0xff]
        %v1361 = vld [vmem:[%s6 + $0xc0] sm:$0xff]
        %v1362 = vld [vmem:[%s6 + $0xc8] sm:$0xff]
        %v1363 = vld [vmem:[%s6 + $0xd0] sm:$0xff]
        %v1364 = vld [vmem:[%s6 + $0xd8] sm:$0xff]
        %v1365 = vld [vmem:[%s6 + $0xe0] sm:$0xff]
        %v1366 = vld [vmem:[%s6 + $0xe8] sm:$0xff]
        %v1367 = vld [vmem:[%s6 + $0xf0] sm:$0xff]
        %v1368 = vld [vmem:[%s6 + $0xf8] sm:$0xff]
        %v1369 = vld [vmem:[%s7] sm:$0x1]
        %v1371 = vlaneseq
        %v1372 = vshrl.u32 %v1371, 7
        %v1373 = vsub.s32 0, %v1372
        %v1374 = vrot.slane %v1369, %v1373
        %1376 = vmatprep.subr.mxu0 0.0
        %1377 = vmatpush1.msra.mxu0 %v1337
        %1378 = vmatprep.subr.mxu0 0.0
        %1379 = vmatpush1.msra.mxu0 %v1338
        %1380 = vmatprep.subr.mxu0 0.0
        %1381 = vmatpush1.msra.mxu0 %v1339
        %1382 = vmatprep.subr.mxu0 0.0
        %1383 = vmatpush1.msra.mxu0 %v1340
        %1384 = vmatprep.subr.mxu0 0.0
        %1385 = vmatpush1.msra.mxu0 %v1341
        %1386 = vmatprep.subr.mxu0 0.0
        %1387 = vmatpush1.msra.mxu0 %v1342
        %1388 = vmatprep.subr.mxu0 0.0
        %1389 = vmatpush1.msra.mxu0 %v1343
        %1390 = vmatprep.subr.mxu0 0.0
        %1391 = vmatpush1.msra.mxu0 %v1344
        %1392 = vmatprep.subr.mxu0 0.0
        %1393 = vmatpush1.msra.mxu0 %v1345
        %1394 = vmatprep.subr.mxu0 0.0
        %1395 = vmatpush1.msra.mxu0 %v1346
        %1396 = vmatprep.subr.mxu0 0.0
        %1397 = vmatpush1.msra.mxu0 %v1347
        %1398 = vmatprep.subr.mxu0 0.0
        %1399 = vmatpush1.msra.mxu0 %v1348
        %1400 = vmatprep.subr.mxu0 0.0
        %1401 = vmatpush1.msra.mxu0 %v1349
        %1402 = vmatprep.subr.mxu0 0.0
        %1403 = vmatpush1.msra.mxu0 %v1350
        %1404 = vmatprep.subr.mxu0 0.0
        %1405 = vmatpush1.msra.mxu0 %v1351
        %1406 = vmatprep.subr.mxu0 0.0
        %1407 = vmatpush1.msra.mxu0 %v1352
        %1408 = vmatprep.subr.mxu0 0.0
        %1409 = vmatpush1.msra.mxu0 %v1353
        %1410 = vmatprep.subr.mxu0 0.0
        %1411 = vmatpush1.msra.mxu0 %v1354
        %1412 = vmatprep.subr.mxu0 0.0
        %1413 = vmatpush1.msra.mxu0 %v1355
        %1414 = vmatprep.subr.mxu0 0.0
        %1415 = vmatpush1.msra.mxu0 %v1356
        %1416 = vmatprep.subr.mxu0 0.0
        %1417 = vmatpush1.msra.mxu0 %v1357
        %1418 = vmatprep.subr.mxu0 0.0
        %1419 = vmatpush1.msra.mxu0 %v1358
        %1420 = vmatprep.subr.mxu0 0.0
        %1421 = vmatpush1.msra.mxu0 %v1359
        %1422 = vmatprep.subr.mxu0 0.0
        %1423 = vmatpush1.msra.mxu0 %v1360
        %1424 = vmatprep.subr.mxu0 0.0
        %1425 = vmatpush1.msra.mxu0 %v1361
        %1426 = vmatprep.subr.mxu0 0.0
        %1427 = vmatpush1.msra.mxu0 %v1362
        %1428 = vmatprep.subr.mxu0 0.0
        %1429 = vmatpush1.msra.mxu0 %v1363
        %1430 = vmatprep.subr.mxu0 0.0
        %1431 = vmatpush1.msra.mxu0 %v1364
        %1432 = vmatprep.subr.mxu0 0.0
        %1433 = vmatpush1.msra.mxu0 %v1365
        %1434 = vmatprep.subr.mxu0 0.0
        %1435 = vmatpush1.msra.mxu0 %v1366
        %1436 = vmatprep.subr.mxu0 0.0
        %1437 = vmatpush1.msra.mxu0 %v1367
        %1438 = vmatprep.subr.mxu0 0.0
        %1439 = vmatpush1.msra.mxu0 %v1368
        %1440 = vmatprep.mubr.f32.mxu0 %v1079
        %1441 = vmatmul.mubr.f32.gmra.mrb[0].mxu0 %v1334
        %v1442 = vpop.f32.mrb[0].mxu0
        %v1443 = vadd.f32 %v1374, %v1442
        %v1444 = vpop.f32.mrb[0].mxu0
        %1445 = vmatprep.mubr.f32.mxu0 %v1084
        %1446 = vmatmul.mubr.f32.gmra.mrb[0].mxu0 %v1336
        %v1447 = vpop.f32.mrb[0].mxu0
        %v1448 = vadd.f32 %v1374, %v1447
        %v1449 = vpop.f32.mrb[0].mxu0
        %1450 = vdwg.mxu0
        %v1451 = vmax.f32 %v1443, 0.0
        %v1452 = vmax.f32 %v1448, 0.0
        %v1453 = vld [vmem:[%s8] sm:$0xff]
        %v1454 = vld [vmem:[%s9] sm:$0xff]
        %1456 = vset.pattern.permute.xlu0 0
        %1457 = vperm.xlu0 %1456, %v1454
        %v1458 = vpop.permute.xlu0 %1457
        %v1461 = vsel %vm394, %v1453, 0
        %v1464 = vsel %vm394, %v1451, 0
        %v1467 = vsel %vm394, %v1452, 0
        %1469 = vmatprep.subr.mxu0 0.0
        %1470 = vmatpush1.xpose.msra.mxu0 %v1464
        %1471 = vmatprep.subr.mxu0 0.0
        %1472 = vmatpush1.xpose.msra.mxu0 %v1467
        %1473 = vmatprep.subr.mxu0 0.0
        %1474 = vmatpush1.xpose.msra.mxu0 0.0
        %1475 = vmatprep.subr.mxu0 0.0
        %1476 = vmatpush1.xpose.msra.mxu0 0.0
        %1477 = vmatprep.subr.mxu0 0.0
        %1478 = vmatpush1.xpose.msra.mxu0 0.0
        %1479 = vmatprep.subr.mxu0 0.0
        %1480 = vmatpush1.xpose.msra.mxu0 0.0
        %1481 = vmatprep.subr.mxu0 0.0
        %1482 = vmatpush1.xpose.msra.mxu0 0.0
        %1483 = vmatprep.subr.mxu0 0.0
        %1484 = vmatpush1.xpose.msra.mxu0 0.0
        %1485 = vmatprep.subr.mxu0 0.0
        %1486 = vmatpush1.xpose.msra.mxu0 0.0
        %1487 = vmatprep.subr.mxu0 0.0
        %1488 = vmatpush1.xpose.msra.mxu0 0.0
        %1489 = vmatprep.subr.mxu0 0.0
        %1490 = vmatpush1.xpose.msra.mxu0 0.0
        %1491 = vmatprep.subr.mxu0 0.0
        %1492 = vmatpush1.xpose.msra.mxu0 0.0
        %1493 = vmatprep.subr.mxu0 0.0
        %1494 = vmatpush1.xpose.msra.mxu0 0.0
        %1495 = vmatprep.subr.mxu0 0.0
        %1496 = vmatpush1.xpose.msra.mxu0 0.0
        %1497 = vmatprep.subr.mxu0 0.0
        %1498 = vmatpush1.xpose.msra.mxu0 0.0
        %1499 = vmatprep.subr.mxu0 0.0
        %1500 = vmatpush1.xpose.msra.mxu0 0.0
        %1501 = vmatprep.subr.mxu0 0.0
        %1502 = vmatpush1.xpose.msra.mxu0 0.0
        %1503 = vmatprep.subr.mxu0 0.0
        %1504 = vmatpush1.xpose.msra.mxu0 0.0
        %1505 = vmatprep.subr.mxu0 0.0
        %1506 = vmatpush1.xpose.msra.mxu0 0.0
        %1507 = vmatprep.subr.mxu0 0.0
        %1508 = vmatpush1.xpose.msra.mxu0 0.0
        %1509 = vmatprep.subr.mxu0 0.0
        %1510 = vmatpush1.xpose.msra.mxu0 0.0
        %1511 = vmatprep.subr.mxu0 0.0
        %1512 = vmatpush1.xpose.msra.mxu0 0.0
        %1513 = vmatprep.subr.mxu0 0.0
        %1514 = vmatpush1.xpose.msra.mxu0 0.0
        %1515 = vmatprep.subr.mxu0 0.0
        %1516 = vmatpush1.xpose.msra.mxu0 0.0
        %1517 = vmatprep.subr.mxu0 0.0
        %1518 = vmatpush1.xpose.msra.mxu0 0.0
        %1519 = vmatprep.subr.mxu0 0.0
        %1520 = vmatpush1.xpose.msra.mxu0 0.0
        %1521 = vmatprep.subr.mxu0 0.0
        %1522 = vmatpush1.xpose.msra.mxu0 0.0
        %1523 = vmatprep.subr.mxu0 0.0
        %1524 = vmatpush1.xpose.msra.mxu0 0.0
        %1525 = vmatprep.subr.mxu0 0.0
        %1526 = vmatpush1.xpose.msra.mxu0 0.0
        %1527 = vmatprep.subr.mxu0 0.0
        %1528 = vmatpush1.xpose.msra.mxu0 0.0
        %1529 = vmatprep.subr.mxu0 0.0
        %1530 = vmatpush1.xpose.msra.mxu0 0.0
        %1531 = vmatprep.subr.mxu0 0.0
        %1532 = vmatpush1.xpose.msra.mxu0 0.0
        %1533 = vmatprep.mubr.f32.mxu0 0.0
        %1534 = vmatmul.mubr.f32.gmra.mrb[0].mxu0 %v1461
        %v1535 = vpop.f32.mrb[0].mxu0
        %v1536 = vadd.f32 %v1458, %v1535
        %v1537 = vpop.f32.mrb[0].mxu0
        %1538 = vdwg.mxu0
        %v1539 = vsel %vm1243, %v1536, -inf
        %1540 = vmax.xlane.f32.xlu0 %v1539
        %v1541 = vpop.xlane.xlu0 %1540
        %v1542 = vsub.f32 %v1536, %v1541
        %v1543 = vmul.f32 %v1542, 1.442695
        %v1544 = vpow.pop %v1543
        %v1545 = vsel %vm1243, %v1544, 0.0
        %1546 = vadd.xlane.f32.xlu0 %v1545
        %v1547 = vpop.xlane.xlu0 %1546
        %v1548 = vrcp.pop %v1547
        %v1549 = vmul.f32 %v1544, %v1548
        %v1550 = vsel %vm1243, %v1549, -inf
        %v1551 = vrot.slane %v1550, 4
        %v1552 = vmax.f32 %v1550, %v1551
        %v1553 = vrot.slane %v1552, 2
        %v1554 = vmax.f32 %v1552, %v1553
        %v1555 = vrot.slane %v1554, 1
        %v1556 = vmax.f32 %v1554, %v1555
        %v1557 = vsub.f32 %v1549, %v1556
        %v1558 = vmul.f32 %v1557, 1.442695
        %v1559 = vpow.pop %v1558
        %v1560 = vsel %vm1243, %v1559, 0.0
        %v1561 = vrot.slane %v1560, 4
        %v1562 = vadd.f32 %v1560, %v1561
        %v1563 = vrot.slane %v1562, 2
        %v1564 = vadd.f32 %v1562, %v1563
        %v1565 = vrot.slane %v1564, 1
        %v1566 = vadd.f32 %v1564, %v1565
        %v1567 = vrcp.pop %v1566
        %v1568 = vmul.f32 %v1559, %v1567
        %v1570 = vsel %vm1243, %v1568, 0
        %1572 = vmatprep.subr.mxu0 0.0
        %1573 = vmatpush1.msra.mxu0 %v1451
        %1574 = vmatprep.subr.mxu0 0.0
        %1575 = vmatpush1.msra.mxu0 %v1452
        %1576 = vmatprep.subr.mxu0 0.0
        %1577 = vmatpush1.msra.mxu0 0.0
        %1578 = vmatprep.subr.mxu0 0.0
        %1579 = vmatpush1.msra.mxu0 0.0
        %1580 = vmatprep.subr.mxu0 0.0
        %1581 = vmatpush1.msra.mxu0 0.0
        %1582 = vmatprep.subr.mxu0 0.0
        %1583 = vmatpush1.msra.mxu0 0.0
        %1584 = vmatprep.subr.mxu0 0.0
        %1585 = vmatpush1.msra.mxu0 0.0
        %1586 = vmatprep.subr.mxu0 0.0
        %1587 = vmatpush1.msra.mxu0 0.0
        %1588 = vmatprep.subr.mxu0 0.0
        %1589 = vmatpush1.msra.mxu0 0.0
        %1590 = vmatprep.subr.mxu0 0.0
        %1591 = vmatpush1.msra.mxu0 0.0
        %1592 = vmatprep.subr.mxu0 0.0
        %1593 = vmatpush1.msra.mxu0 0.0
        %1594 = vmatprep.subr.mxu0 0.0
        %1595 = vmatpush1.msra.mxu0 0.0
        %1596 = vmatprep.subr.mxu0 0.0
        %1597 = vmatpush1.msra.mxu0 0.0
        %1598 = vmatprep.subr.mxu0 0.0
        %1599 = vmatpush1.msra.mxu0 0.0
        %1600 = vmatprep.subr.mxu0 0.0
        %1601 = vmatpush1.msra.mxu0 0.0
        %1602 = vmatprep.subr.mxu0 0.0
        %1603 = vmatpush1.msra.mxu0 0.0
        %1604 = vmatprep.subr.mxu0 0.0
        %1605 = vmatpush1.msra.mxu0 0.0
        %1606 = vmatprep.subr.mxu0 0.0
        %1607 = vmatpush1.msra.mxu0 0.0
        %1608 = vmatprep.subr.mxu0 0.0
        %1609 = vmatpush1.msra.mxu0 0.0
        %1610 = vmatprep.subr.mxu0 0.0
        %1611 = vmatpush1.msra.mxu0 0.0
        %1612 = vmatprep.subr.mxu0 0.0
        %1613 = vmatpush1.msra.mxu0 0.0
        %1614 = vmatprep.subr.mxu0 0.0
        %1615 = vmatpush1.msra.mxu0 0.0
        %1616 = vmatprep.subr.mxu0 0.0
        %1617 = vmatpush1.msra.mxu0 0.0
        %1618 = vmatprep.subr.mxu0 0.0
        %1619 = vmatpush1.msra.mxu0 0.0
        %1620 = vmatprep.subr.mxu0 0.0
        %1621 = vmatpush1.msra.mxu0 0.0
        %1622 = vmatprep.subr.mxu0 0.0
        %1623 = vmatpush1.msra.mxu0 0.0
        %1624 = vmatprep.subr.mxu0 0.0
        %1625 = vmatpush1.msra.mxu0 0.0
        %1626 = vmatprep.subr.mxu0 0.0
        %1627 = vmatpush1.msra.mxu0 0.0
        %1628 = vmatprep.subr.mxu0 0.0
        %1629 = vmatpush1.msra.mxu0 0.0
        %1630 = vmatprep.subr.mxu0 0.0
        %1631 = vmatpush1.msra.mxu0 0.0
        %1632 = vmatprep.subr.mxu0 0.0
        %1633 = vmatpush1.msra.mxu0 0.0
        %1634 = vmatprep.subr.mxu0 0.0
        %1635 = vmatpush1.msra.mxu0 0.0
        %1636 = vmatprep.mubr.f32.mxu0 0.0
        %1637 = vmatmul.mubr.f32.gmra.mrb[0].mxu0 %v1570
        %v1638 = vpop.f32.mrb[0].mxu0
        %v1639 = vadd.f32 0.0, %v1638
        %v1640 = vpop.f32.mrb[0].mxu0
        %1641 = vdwg.mxu0
        %1642 = vst.msk [vmem:[%s367] sm:$0xff] %vm394, %v1639
        %s1643 = sand.u32 %s252, 1
        %s1644 = scalar_lea.sflag [#allocation3], %s1643
        %s1645 = sand.u32 %s252, 1
        %s1646 = smul.addr %s1645, 8
        %s1647 = scalar_lea.vmem [#allocation2], %s1646
        // Predicated region
        $region61: #{tpu_custom_call.1} parent=59 // pred_check
          %p1648 = pneg %p262
        $region62: #{tpu_custom_call.1} parent=59 // pred_check_branch
          %1650 = sbr.rel (%p1648) target = $region64
        $region63: #{tpu_custom_call.1} parent=59 // pred_region
          %s1652 = ssub.s32 128, 128
          %1653 = vsyncadd %s1644, %s1652
          %s1654 = smul.addr %s24, 128
          %s1655 = scalar_lea.hbm %s10, %s1654
          %s1657 = sshll.u32 %s1647, 4
          %s1658 = int_to_ptr.vmem [resolvable:$true] %s1657
          %1660 = dma.vmem_to_hbm [thread:$0]  %s1658, 128, %s1655, %s1644
        $region64: #{tpu_custom_call.1} parent=59 // pred_fallthru
          _
      $region60: #{tpu_custom_call.1} parent=5 // pred_fallthru
        _
      %p1661 = scmp.le.s32.totalorder 2, %s19
      // Predicated region
      $region65: #{tpu_custom_call.1} parent=5 // pred_check
        %p1662 = pneg %p1661
      $region66: #{tpu_custom_call.1} parent=5 // pred_check_branch
        %1664 = sbr.rel (%p1662) target = $region68
      $region67: #{tpu_custom_call.1} parent=5 // pred_region
        %s1665 = ssub.s32 %s19, 2
        // Predicated region
        $region69: #{tpu_custom_call.1} parent=67 // pred_check
          %p1666 = pneg %p268
        $region70: #{tpu_custom_call.1} parent=67 // pred_check_branch
          %1668 = sbr.rel (%p1666) target = $region72
        $region71: #{tpu_custom_call.1} parent=67 // pred_region
          %s1669 = sand.u32 %s253, 1
          %s1670 = scalar_lea.sflag [#allocation3], %s1669
          %s1671 = sand.u32 %s253, 1
          %s1672 = smul.addr %s1671, 8
          %s1673 = scalar_lea.vmem [#allocation2], %s1672
          %1674 = dma.done %s1670, 128
        $region72: #{tpu_custom_call.1} parent=67 // pred_fallthru
          _
      $region68: #{tpu_custom_call.1} parent=5 // pred_fallthru
        _
    $region6: #{tpu_custom_call.1} parent=1 // loop_footer
      %s23 = sadd.s32 1, %s19
    $region7: #{tpu_custom_call.1} parent=1 // loop_footer_branch
      %18 = sbr.rel target = $region3
    $region8: #{tpu_custom_call.1} parent=1 // loop_exit
      _
    %1675 = vsyncpa [#allocation3], 1
    %s1676 = scalar_lea.sflag [#allocation3], 1
    %1677 = vsyncpa %s1676, 1

</llo_original>
